<compile_context>
chip_gen: v7x
topology: tpu7x:2x2x1
jax: 0.10.0
libtpu: 0.0.40
codegen_flags: <defaults>
</compile_context>

<pallas_src>
import jax
import jax.numpy as jnp
from jax.experimental import pallas as pl
from jax.experimental.pallas import tpu as pltpu


def _edge_dot_kernel(a_ref, b_ref, o_ref):
    # a_ref, b_ref: (TE, D) VMEM tiles (edges on sublanes); o_ref: (1, TE).
    a = a_ref[...]
    b = b_ref[...]
    if a.dtype != jnp.float32:
        # Low-precision inputs: accumulate in f32 (required on v5e, cheap elsewhere).
        a = a.astype(jnp.float32)
        b = b.astype(jnp.float32)
    # Per-edge dot product: reduce over the feature (lane) axis, then lay the
    # TE results out lane-dense so the output DMA is a dense store.
    s = jnp.sum(a * b, axis=1)                                    # (TE,) f32
    o_ref[...] = s.reshape(o_ref.shape).astype(o_ref.dtype)


def _round_up(x, m):
    return (x + m - 1) // m * m


def _vmem_budgets():
    """Per-generation limits: (vmem_limit_bytes, tile_budget_bytes, n_cores)."""
    vmem_capacity = 64 * 1024 * 1024      # conservative default (v7x-sized)
    n_cores = 1
    try:
        info = pltpu.get_tpu_info()
        vmem_capacity = int(getattr(info, "vmem_capacity_bytes", vmem_capacity))
        for attr in ("num_tensorcores", "tensorcores_per_chip",
                     "num_cores", "cores_per_chip"):
            v = getattr(info, attr, None)
            if v:
                n_cores = int(v)
                break
    except Exception:
        pass
    # 128 MiB parts (v5e/v6e) -> 64 MiB scoped limit; 64 MiB v7x -> 32 MiB.
    vmem_limit = min(vmem_capacity // 2, 64 * 1024 * 1024)
    tile_budget = (vmem_limit * 3) // 4   # headroom for output buffers etc.
    return vmem_limit, tile_budget, n_cores


def _pick_edge_tile(num_edges, feat_dim, itemsize, tile_budget, n_cores):
    """Largest edge tile (multiple of 128 sublanes) fitting the VMEM budget."""
    e_min = _round_up(max(num_edges, 1), 128)
    # VMEM tiles lane-pad the minor dim to 128, so budget with the padded width.
    row_bytes = _round_up(feat_dim, 128) * itemsize
    # Working set: 2 operands x 2 pipeline buffers x (TE, row_bytes).
    te = (tile_budget // (4 * row_bytes)) // 128 * 128
    te = max(128, min(int(te), 32768))
    if n_cores > 1 and e_min // 2 >= 2048:
        # Megacore chips only: split small problems across cores, but never
        # below a few-thousand-lane tile (fixed per-step cost dominates there).
        te = min(te, _round_up(e_min // 2, 128))
    return min(te, e_min)


def han_edge_decoder(x_dict, edge_label_index, target):
    """Pallas implementation of HANEdgeDecoder.forward.

    x_dict: dict[str, (N_i, D) array]
    edge_label_index: (2, E) int array
    target: (src_type, rel, dst_type)
    """
    rel_src, rel_dst = target[0], target[-1]
    src_tab = x_dict[rel_src]
    dst_tab = x_dict[rel_dst]
    dtype = jnp.result_type(src_tab.dtype, dst_tab.dtype)

    idx_src = edge_label_index[0].astype(jnp.int32)
    idx_dst = edge_label_index[1].astype(jnp.int32)
    E = int(idx_src.shape[0])
    D = int(src_tab.shape[1])

    if E == 0:
        # torch would return an empty tensor; avoid a zero-size pallas_call.
        return jnp.zeros((0,), dtype)

    # Row gather: contiguous D-wide rows from the original (N, D) tables.
    # (Note: jnp.take clamps out-of-range indices where torch would raise.)
    a = jnp.take(src_tab, idx_src, axis=0).astype(dtype)   # (E, D)
    b = jnp.take(dst_tab, idx_dst, axis=0).astype(dtype)   # (E, D)

    itemsize = jnp.dtype(dtype).itemsize
    vmem_limit, tile_budget, n_cores = _vmem_budgets()
    TE = _pick_edge_tile(E, D, itemsize, tile_budget, n_cores)
    num_tiles = pl.cdiv(E, TE)

    cost = pl.CostEstimate(
        flops=2 * E * D,
        transcendentals=0,
        bytes_accessed=(2 * E * D + E) * itemsize,
    )

    out = pl.pallas_call(
        _edge_dot_kernel,
        out_shape=jax.ShapeDtypeStruct((1, E), dtype),
        grid_spec=pltpu.PrefetchScalarGridSpec(
            num_scalar_prefetch=0,
            grid=(num_tiles,),
            in_specs=[
                pl.BlockSpec((TE, D), lambda i: (i, 0)),
                pl.BlockSpec((TE, D), lambda i: (i, 0)),
            ],
            out_specs=pl.BlockSpec((1, TE), lambda i: (0, i)),
        ),
        compiler_params=pltpu.CompilerParams(
            dimension_semantics=("parallel",),
            vmem_limit_bytes=vmem_limit,
        ),
        cost_estimate=cost,
    )(a, b)

    # torch .squeeze(): (E, 1, 1) -> (E,), or a 0-d scalar when E == 1.
    return jnp.squeeze(out[0])


def _reference(x_dict, edge_label_index, target):
    A = jnp.take(x_dict[target[0]], edge_label_index[0], axis=0)
    B = jnp.take(x_dict[target[-1]], edge_label_index[1], axis=0)
    return jnp.squeeze(jnp.einsum("ed,ed->e", A, B))


if __name__ == "__main__":
    key = jax.random.PRNGKey(0)
    k1, k2, k3, k4 = jax.random.split(key, 4)

    # Small synthetic heterogeneous graph: 64 "user" nodes, 48 "item" nodes,
    # hidden dim 32, 200 labeled edges (not a multiple of 128 -> exercises the
    # ragged-tail partial-block path with no wrapper-side padding).
    n_user, n_item, D, E = 64, 48, 32, 200
    target = ("user", "rates", "item")

    x_dict = {
        "user": jax.random.normal(k1, (n_user, D), dtype=jnp.float32),
        "item": jax.random.normal(k2, (n_item, D), dtype=jnp.float32),
    }
    edge_label_index = jnp.stack(
        [
            jax.random.randint(k3, (E,), 0, n_user),
            jax.random.randint(k4, (E,), 0, n_item),
        ],
        axis=0,
    )  # (2, E)

    out = han_edge_decoder(x_dict, edge_label_index, target)
    out = jax.block_until_ready(out)

    ref = _reference(x_dict, edge_label_index, target)
    assert out.shape == (E,), out.shape
    assert jnp.allclose(out, ref, atol=1e-4, rtol=1e-4), "mismatch vs reference"

    print("KERNEL_OK")
</pallas_src>

<mosaic_0001>
module attributes {stable_mosaic.version = 11 : i64} {
  func.func @_edge_dot_kernel(%arg0: i32, %arg1: memref<256x32xf32, #tpu.memory_space<vmem>>, %arg2: memref<256x32xf32, #tpu.memory_space<vmem>>, %arg3: memref<1x256xf32, #tpu.memory_space<vmem>>) attributes {dimension_semantics = [#tpu.dimension_semantics<parallel>], iteration_bounds = array<i64: 1>, scalar_prefetch = 0 : i64, scratch_operands = 0 : i64, tpu.core_type = #tpu.core_type<tc>, window_params = [{transform_indices = @transform_0, window_bounds = array<i64: 256, 32>}, {transform_indices = @transform_1, window_bounds = array<i64: 256, 32>}, {transform_indices = @transform_2, window_bounds = array<i64: 1, 256>}]} {
    %c0 = arith.constant 0 : index
    %c0_0 = arith.constant 0 : index
    %0 = vector.load %arg1[%c0, %c0_0] : memref<256x32xf32, #tpu.memory_space<vmem>>, vector<256x32xf32>
    %c0_1 = arith.constant 0 : index
    %c0_2 = arith.constant 0 : index
    %1 = vector.load %arg2[%c0_1, %c0_2] : memref<256x32xf32, #tpu.memory_space<vmem>>, vector<256x32xf32>
    %2 = arith.mulf %0, %1 : vector<256x32xf32>
    %cst = arith.constant dense<0.000000e+00> : vector<256xf32>
    %3 = vector.multi_reduction <add>, %2, %cst [1] : vector<256x32xf32> to vector<256xf32>
    %4 = vector.shape_cast %3 : vector<256xf32> to vector<1x256xf32>
    %c0_3 = arith.constant 0 : index
    %c0_4 = arith.constant 0 : index
    %5 = vector.load %arg3[%c0_3, %c0_4] : memref<1x256xf32, #tpu.memory_space<vmem>>, vector<1x256xf32>
    tpu.vector_store %arg3[%c0_3, %c0_4], %4 {strides = array<i32>} : memref<1x256xf32, #tpu.memory_space<vmem>>, vector<1x256xf32>,
    return
  }
  func.func @transform_0(%arg0: i32) -> (i32, i32) {
    %c0_i32 = arith.constant 0 : i32
    %c0_i32_0 = arith.constant 0 : i32
    return %arg0, %c0_i32 : i32, i32
  }
  func.func @transform_1(%arg0: i32) -> (i32, i32) {
    %c0_i32 = arith.constant 0 : i32
    %c0_i32_0 = arith.constant 0 : i32
    return %arg0, %c0_i32 : i32, i32
  }
  func.func @transform_2(%arg0: i32) -> (i32, i32) {
    %c0_i32 = arith.constant 0 : i32
    %c0_i32_0 = arith.constant 0 : i32
    return %c0_i32, %arg0 : i32, i32
  }
}

</mosaic_0001>

<llo_original>
// kernel: tpu_custom_call.1
$region0: #{tpu_custom_call.1}
  #allocation0 [shape = 'u32[]', space=smem, size = 0x4, offset = 0x4, fixed_abs, tag = 'smem constant byte address 0x4 - core index']
  #allocation1 [shape = 'u32[144,128]{1,0:T(1,128)}', space=vmem, size = 0x12000, scoped, tag = 'internal scratch']
  %s0 = inlined_call_operand.vmem [shape: f32[200,32], index: 0, kind: input, shape index: {}]
  %s1 = inlined_call_operand.vmem [shape: f32[200,32], index: 1, kind: input, shape index: {}]
  %s2 = inlined_call_operand.hbm [shape: f32[1,200], index: 2, kind: output, shape index: {}]
  %s3 = sld [smem:[#allocation0]]
  $region18: #{tpu_custom_call.1} parent=0
    _
  %s5 = ssub.s32 1, %s3
  %s6 = scalar_select 0, %s5, %s3
  $region1: #{tpu_custom_call.1} parent=0
    #allocation2 [shape = 'u8[1024]{0}', space=vmem, size = 0x400, scoped, tag = 'output window, operand 0, single buffered']
    #allocation3 [shape = 's32[1]{0}', space=sflag, size = 0x4, scoped, tag = 'scoped memory for tpu_custom_call.1']
    %7 = vsyncpa [#allocation3], 0
    // Predicated region
    $region2: #{tpu_custom_call.1} parent=1 // pred_check
      _
    $region3: #{tpu_custom_call.1} parent=1 // pred_check_branch
      %9 = sbr.rel (0) target = $region5
    $region4: #{tpu_custom_call.1} parent=1 // pred_region
      _
    $region5: #{tpu_custom_call.1} parent=1 // pred_fallthru
      _
    // Predicated region
    $region6: #{tpu_custom_call.1} parent=1 // pred_check
      _
    $region7: #{tpu_custom_call.1} parent=1 // pred_check_branch
      %11 = sbr.rel (0) target = $region9
    $region8: #{tpu_custom_call.1} parent=1 // pred_region
      _
    $region9: #{tpu_custom_call.1} parent=1 // pred_fallthru
      _
    %v12 = vld [vmem:[%s0] sm:$0xff]
    %v13 = vld [vmem:[%s0 + $0x8] sm:$0xff]
    %v14 = vld [vmem:[%s0 + $0x10] sm:$0xff]
    %v15 = vld [vmem:[%s0 + $0x18] sm:$0xff]
    %v16 = vld [vmem:[%s0 + $0x20] sm:$0xff]
    %v17 = vld [vmem:[%s0 + $0x28] sm:$0xff]
    %v18 = vld [vmem:[%s0 + $0x30] sm:$0xff]
    %v19 = vld [vmem:[%s0 + $0x38] sm:$0xff]
    %v20 = vld [vmem:[%s0 + $0x40] sm:$0xff]
    %v21 = vld [vmem:[%s0 + $0x48] sm:$0xff]
    %v22 = vld [vmem:[%s0 + $0x50] sm:$0xff]
    %v23 = vld [vmem:[%s0 + $0x58] sm:$0xff]
    %v24 = vld [vmem:[%s0 + $0x60] sm:$0xff]
    %v25 = vld [vmem:[%s0 + $0x68] sm:$0xff]
    %v26 = vld [vmem:[%s0 + $0x70] sm:$0xff]
    %v27 = vld [vmem:[%s0 + $0x78] sm:$0xff]
    %v28 = vld [vmem:[%s0 + $0x80] sm:$0xff]
    %v29 = vld [vmem:[%s0 + $0x88] sm:$0xff]
    %v30 = vld [vmem:[%s0 + $0x90] sm:$0xff]
    %v31 = vld [vmem:[%s0 + $0x98] sm:$0xff]
    %v32 = vld [vmem:[%s0 + $0xa0] sm:$0xff]
    %v33 = vld [vmem:[%s0 + $0xa8] sm:$0xff]
    %v34 = vld [vmem:[%s0 + $0xb0] sm:$0xff]
    %v35 = vld [vmem:[%s0 + $0xb8] sm:$0xff]
    %v36 = vld [vmem:[%s0 + $0xc0] sm:$0xff]
    %v37 = vld [vmem:[%s0 + $0xc8] sm:$0xff]
    %v38 = vld [vmem:[%s0 + $0xd0] sm:$0xff]
    %v39 = vld [vmem:[%s0 + $0xd8] sm:$0xff]
    %v40 = vld [vmem:[%s0 + $0xe0] sm:$0xff]
    %v41 = vld [vmem:[%s0 + $0xe8] sm:$0xff]
    %v42 = vld [vmem:[%s0 + $0xf0] sm:$0xff]
    %v43 = vld [vmem:[%s0 + $0xf8] sm:$0xff]
    %v44 = vld [vmem:[%s1] sm:$0xff]
    %v45 = vld [vmem:[%s1 + $0x8] sm:$0xff]
    %v46 = vld [vmem:[%s1 + $0x10] sm:$0xff]
    %v47 = vld [vmem:[%s1 + $0x18] sm:$0xff]
    %v48 = vld [vmem:[%s1 + $0x20] sm:$0xff]
    %v49 = vld [vmem:[%s1 + $0x28] sm:$0xff]
    %v50 = vld [vmem:[%s1 + $0x30] sm:$0xff]
    %v51 = vld [vmem:[%s1 + $0x38] sm:$0xff]
    %v52 = vld [vmem:[%s1 + $0x40] sm:$0xff]
    %v53 = vld [vmem:[%s1 + $0x48] sm:$0xff]
    %v54 = vld [vmem:[%s1 + $0x50] sm:$0xff]
    %v55 = vld [vmem:[%s1 + $0x58] sm:$0xff]
    %v56 = vld [vmem:[%s1 + $0x60] sm:$0xff]
    %v57 = vld [vmem:[%s1 + $0x68] sm:$0xff]
    %v58 = vld [vmem:[%s1 + $0x70] sm:$0xff]
    %v59 = vld [vmem:[%s1 + $0x78] sm:$0xff]
    %v60 = vld [vmem:[%s1 + $0x80] sm:$0xff]
    %v61 = vld [vmem:[%s1 + $0x88] sm:$0xff]
    %v62 = vld [vmem:[%s1 + $0x90] sm:$0xff]
    %v63 = vld [vmem:[%s1 + $0x98] sm:$0xff]
    %v64 = vld [vmem:[%s1 + $0xa0] sm:$0xff]
    %v65 = vld [vmem:[%s1 + $0xa8] sm:$0xff]
    %v66 = vld [vmem:[%s1 + $0xb0] sm:$0xff]
    %v67 = vld [vmem:[%s1 + $0xb8] sm:$0xff]
    %v68 = vld [vmem:[%s1 + $0xc0] sm:$0xff]
    %v69 = vld [vmem:[%s1 + $0xc8] sm:$0xff]
    %v70 = vld [vmem:[%s1 + $0xd0] sm:$0xff]
    %v71 = vld [vmem:[%s1 + $0xd8] sm:$0xff]
    %v72 = vld [vmem:[%s1 + $0xe0] sm:$0xff]
    %v73 = vld [vmem:[%s1 + $0xe8] sm:$0xff]
    %v74 = vld [vmem:[%s1 + $0xf0] sm:$0xff]
    %v75 = vld [vmem:[%s1 + $0xf8] sm:$0xff]
    %v76 = vmul.f32 %v12, %v44
    %v77 = vmul.f32 %v13, %v45
    %v78 = vmul.f32 %v14, %v46
    %v79 = vmul.f32 %v15, %v47
    %v80 = vmul.f32 %v16, %v48
    %v81 = vmul.f32 %v17, %v49
    %v82 = vmul.f32 %v18, %v50
    %v83 = vmul.f32 %v19, %v51
    %v84 = vmul.f32 %v20, %v52
    %v85 = vmul.f32 %v21, %v53
    %v86 = vmul.f32 %v22, %v54
    %v87 = vmul.f32 %v23, %v55
    %v88 = vmul.f32 %v24, %v56
    %v89 = vmul.f32 %v25, %v57
    %v90 = vmul.f32 %v26, %v58
    %v91 = vmul.f32 %v27, %v59
    %v92 = vmul.f32 %v28, %v60
    %v93 = vmul.f32 %v29, %v61
    %v94 = vmul.f32 %v30, %v62
    %v95 = vmul.f32 %v31, %v63
    %v96 = vmul.f32 %v32, %v64
    %v97 = vmul.f32 %v33, %v65
    %v98 = vmul.f32 %v34, %v66
    %v99 = vmul.f32 %v35, %v67
    %v100 = vmul.f32 %v36, %v68
    %v101 = vmul.f32 %v37, %v69
    %v102 = vmul.f32 %v38, %v70
    %v103 = vmul.f32 %v39, %v71
    %v104 = vmul.f32 %v40, %v72
    %v105 = vmul.f32 %v41, %v73
    %v106 = vmul.f32 %v42, %v74
    %v107 = vmul.f32 %v43, %v75
    %vm108 = vcmask 261120
    %v109 = vsel %vm108, %v76, 0.0
    %110 = vadd.xlane.f32.xlu0 %v109
    %v111 = vpop.xlane.xlu0 %110
    %v112 = vsel %vm108, %v77, 0.0
    %113 = vadd.xlane.f32.xlu0 %v112
    %v114 = vpop.xlane.xlu0 %113
    %v115 = vsel %vm108, %v78, 0.0
    %116 = vadd.xlane.f32.xlu0 %v115
    %v117 = vpop.xlane.xlu0 %116
    %v118 = vsel %vm108, %v79, 0.0
    %119 = vadd.xlane.f32.xlu0 %v118
    %v120 = vpop.xlane.xlu0 %119
    %v121 = vsel %vm108, %v80, 0.0
    %122 = vadd.xlane.f32.xlu0 %v121
    %v123 = vpop.xlane.xlu0 %122
    %v124 = vsel %vm108, %v81, 0.0
    %125 = vadd.xlane.f32.xlu0 %v124
    %v126 = vpop.xlane.xlu0 %125
    %v127 = vsel %vm108, %v82, 0.0
    %128 = vadd.xlane.f32.xlu0 %v127
    %v129 = vpop.xlane.xlu0 %128
    %v130 = vsel %vm108, %v83, 0.0
    %131 = vadd.xlane.f32.xlu0 %v130
    %v132 = vpop.xlane.xlu0 %131
    %v133 = vsel %vm108, %v84, 0.0
    %134 = vadd.xlane.f32.xlu0 %v133
    %v135 = vpop.xlane.xlu0 %134
    %v136 = vsel %vm108, %v85, 0.0
    %137 = vadd.xlane.f32.xlu0 %v136
    %v138 = vpop.xlane.xlu0 %137
    %v139 = vsel %vm108, %v86, 0.0
    %140 = vadd.xlane.f32.xlu0 %v139
    %v141 = vpop.xlane.xlu0 %140
    %v142 = vsel %vm108, %v87, 0.0
    %143 = vadd.xlane.f32.xlu0 %v142
    %v144 = vpop.xlane.xlu0 %143
    %v145 = vsel %vm108, %v88, 0.0
    %146 = vadd.xlane.f32.xlu0 %v145
    %v147 = vpop.xlane.xlu0 %146
    %v148 = vsel %vm108, %v89, 0.0
    %149 = vadd.xlane.f32.xlu0 %v148
    %v150 = vpop.xlane.xlu0 %149
    %v151 = vsel %vm108, %v90, 0.0
    %152 = vadd.xlane.f32.xlu0 %v151
    %v153 = vpop.xlane.xlu0 %152
    %v154 = vsel %vm108, %v91, 0.0
    %155 = vadd.xlane.f32.xlu0 %v154
    %v156 = vpop.xlane.xlu0 %155
    %v157 = vsel %vm108, %v92, 0.0
    %158 = vadd.xlane.f32.xlu0 %v157
    %v159 = vpop.xlane.xlu0 %158
    %v160 = vsel %vm108, %v93, 0.0
    %161 = vadd.xlane.f32.xlu0 %v160
    %v162 = vpop.xlane.xlu0 %161
    %v163 = vsel %vm108, %v94, 0.0
    %164 = vadd.xlane.f32.xlu0 %v163
    %v165 = vpop.xlane.xlu0 %164
    %v166 = vsel %vm108, %v95, 0.0
    %167 = vadd.xlane.f32.xlu0 %v166
    %v168 = vpop.xlane.xlu0 %167
    %v169 = vsel %vm108, %v96, 0.0
    %170 = vadd.xlane.f32.xlu0 %v169
    %v171 = vpop.xlane.xlu0 %170
    %v172 = vsel %vm108, %v97, 0.0
    %173 = vadd.xlane.f32.xlu0 %v172
    %v174 = vpop.xlane.xlu0 %173
    %v175 = vsel %vm108, %v98, 0.0
    %176 = vadd.xlane.f32.xlu0 %v175
    %v177 = vpop.xlane.xlu0 %176
    %v178 = vsel %vm108, %v99, 0.0
    %179 = vadd.xlane.f32.xlu0 %v178
    %v180 = vpop.xlane.xlu0 %179
    %v181 = vsel %vm108, %v100, 0.0
    %182 = vadd.xlane.f32.xlu0 %v181
    %v183 = vpop.xlane.xlu0 %182
    %v184 = vsel %vm108, %v101, 0.0
    %185 = vadd.xlane.f32.xlu0 %v184
    %v186 = vpop.xlane.xlu0 %185
    %v187 = vsel %vm108, %v102, 0.0
    %188 = vadd.xlane.f32.xlu0 %v187
    %v189 = vpop.xlane.xlu0 %188
    %v190 = vsel %vm108, %v103, 0.0
    %191 = vadd.xlane.f32.xlu0 %v190
    %v192 = vpop.xlane.xlu0 %191
    %v193 = vsel %vm108, %v104, 0.0
    %194 = vadd.xlane.f32.xlu0 %v193
    %v195 = vpop.xlane.xlu0 %194
    %v196 = vsel %vm108, %v105, 0.0
    %197 = vadd.xlane.f32.xlu0 %v196
    %v198 = vpop.xlane.xlu0 %197
    %v199 = vsel %vm108, %v106, 0.0
    %200 = vadd.xlane.f32.xlu0 %v199
    %v201 = vpop.xlane.xlu0 %200
    %v202 = vsel %vm108, %v107, 0.0
    %203 = vadd.xlane.f32.xlu0 %v202
    %v204 = vpop.xlane.xlu0 %203
    %v237 = vlaneseq
    %v238 = vshrl.u32 %v237, 7
    %v239 = vsub.s32 0, %v238
    %v240 = vrot.slane %v111, %v239
    %v241 = vlaneseq
    %v242 = vshrl.u32 %v241, 7
    %v243 = vsub.s32 1, %v242
    %v244 = vrot.slane %v111, %v243
    %v245 = vlaneseq
    %v246 = vshrl.u32 %v245, 7
    %v247 = vsub.s32 2, %v246
    %v248 = vrot.slane %v111, %v247
    %v249 = vlaneseq
    %v250 = vshrl.u32 %v249, 7
    %v251 = vsub.s32 3, %v250
    %v252 = vrot.slane %v111, %v251
    %v253 = vlaneseq
    %v254 = vshrl.u32 %v253, 7
    %v255 = vsub.s32 4, %v254
    %v256 = vrot.slane %v111, %v255
    %v257 = vlaneseq
    %v258 = vshrl.u32 %v257, 7
    %v259 = vsub.s32 5, %v258
    %v260 = vrot.slane %v111, %v259
    %v261 = vlaneseq
    %v262 = vshrl.u32 %v261, 7
    %v263 = vsub.s32 6, %v262
    %v264 = vrot.slane %v111, %v263
    %v265 = vlaneseq
    %v266 = vshrl.u32 %v265, 7
    %v267 = vsub.s32 7, %v266
    %v268 = vrot.slane %v111, %v267
    %v269 = vlaneseq
    %v270 = vshrl.u32 %v269, 7
    %v271 = vsub.s32 0, %v270
    %v272 = vrot.slane %v114, %v271
    %v273 = vlaneseq
    %v274 = vshrl.u32 %v273, 7
    %v275 = vsub.s32 1, %v274
    %v276 = vrot.slane %v114, %v275
    %v277 = vlaneseq
    %v278 = vshrl.u32 %v277, 7
    %v279 = vsub.s32 2, %v278
    %v280 = vrot.slane %v114, %v279
    %v281 = vlaneseq
    %v282 = vshrl.u32 %v281, 7
    %v283 = vsub.s32 3, %v282
    %v284 = vrot.slane %v114, %v283
    %v285 = vlaneseq
    %v286 = vshrl.u32 %v285, 7
    %v287 = vsub.s32 4, %v286
    %v288 = vrot.slane %v114, %v287
    %v289 = vlaneseq
    %v290 = vshrl.u32 %v289, 7
    %v291 = vsub.s32 5, %v290
    %v292 = vrot.slane %v114, %v291
    %v293 = vlaneseq
    %v294 = vshrl.u32 %v293, 7
    %v295 = vsub.s32 6, %v294
    %v296 = vrot.slane %v114, %v295
    %v297 = vlaneseq
    %v298 = vshrl.u32 %v297, 7
    %v299 = vsub.s32 7, %v298
    %v300 = vrot.slane %v114, %v299
    %v301 = vlaneseq
    %v302 = vshrl.u32 %v301, 7
    %v303 = vsub.s32 0, %v302
    %v304 = vrot.slane %v117, %v303
    %v305 = vlaneseq
    %v306 = vshrl.u32 %v305, 7
    %v307 = vsub.s32 1, %v306
    %v308 = vrot.slane %v117, %v307
    %v309 = vlaneseq
    %v310 = vshrl.u32 %v309, 7
    %v311 = vsub.s32 2, %v310
    %v312 = vrot.slane %v117, %v311
    %v313 = vlaneseq
    %v314 = vshrl.u32 %v313, 7
    %v315 = vsub.s32 3, %v314
    %v316 = vrot.slane %v117, %v315
    %v317 = vlaneseq
    %v318 = vshrl.u32 %v317, 7
    %v319 = vsub.s32 4, %v318
    %v320 = vrot.slane %v117, %v319
    %v321 = vlaneseq
    %v322 = vshrl.u32 %v321, 7
    %v323 = vsub.s32 5, %v322
    %v324 = vrot.slane %v117, %v323
    %v325 = vlaneseq
    %v326 = vshrl.u32 %v325, 7
    %v327 = vsub.s32 6, %v326
    %v328 = vrot.slane %v117, %v327
    %v329 = vlaneseq
    %v330 = vshrl.u32 %v329, 7
    %v331 = vsub.s32 7, %v330
    %v332 = vrot.slane %v117, %v331
    %v333 = vlaneseq
    %v334 = vshrl.u32 %v333, 7
    %v335 = vsub.s32 0, %v334
    %v336 = vrot.slane %v120, %v335
    %v337 = vlaneseq
    %v338 = vshrl.u32 %v337, 7
    %v339 = vsub.s32 1, %v338
    %v340 = vrot.slane %v120, %v339
    %v341 = vlaneseq
    %v342 = vshrl.u32 %v341, 7
    %v343 = vsub.s32 2, %v342
    %v344 = vrot.slane %v120, %v343
    %v345 = vlaneseq
    %v346 = vshrl.u32 %v345, 7
    %v347 = vsub.s32 3, %v346
    %v348 = vrot.slane %v120, %v347
    %v349 = vlaneseq
    %v350 = vshrl.u32 %v349, 7
    %v351 = vsub.s32 4, %v350
    %v352 = vrot.slane %v120, %v351
    %v353 = vlaneseq
    %v354 = vshrl.u32 %v353, 7
    %v355 = vsub.s32 5, %v354
    %v356 = vrot.slane %v120, %v355
    %v357 = vlaneseq
    %v358 = vshrl.u32 %v357, 7
    %v359 = vsub.s32 6, %v358
    %v360 = vrot.slane %v120, %v359
    %v361 = vlaneseq
    %v362 = vshrl.u32 %v361, 7
    %v363 = vsub.s32 7, %v362
    %v364 = vrot.slane %v120, %v363
    %v365 = vlaneseq
    %v366 = vshrl.u32 %v365, 7
    %v367 = vsub.s32 0, %v366
    %v368 = vrot.slane %v123, %v367
    %v369 = vlaneseq
    %v370 = vshrl.u32 %v369, 7
    %v371 = vsub.s32 1, %v370
    %v372 = vrot.slane %v123, %v371
    %v373 = vlaneseq
    %v374 = vshrl.u32 %v373, 7
    %v375 = vsub.s32 2, %v374
    %v376 = vrot.slane %v123, %v375
    %v377 = vlaneseq
    %v378 = vshrl.u32 %v377, 7
    %v379 = vsub.s32 3, %v378
    %v380 = vrot.slane %v123, %v379
    %v381 = vlaneseq
    %v382 = vshrl.u32 %v381, 7
    %v383 = vsub.s32 4, %v382
    %v384 = vrot.slane %v123, %v383
    %v385 = vlaneseq
    %v386 = vshrl.u32 %v385, 7
    %v387 = vsub.s32 5, %v386
    %v388 = vrot.slane %v123, %v387
    %v389 = vlaneseq
    %v390 = vshrl.u32 %v389, 7
    %v391 = vsub.s32 6, %v390
    %v392 = vrot.slane %v123, %v391
    %v393 = vlaneseq
    %v394 = vshrl.u32 %v393, 7
    %v395 = vsub.s32 7, %v394
    %v396 = vrot.slane %v123, %v395
    %v397 = vlaneseq
    %v398 = vshrl.u32 %v397, 7
    %v399 = vsub.s32 0, %v398
    %v400 = vrot.slane %v126, %v399
    %v401 = vlaneseq
    %v402 = vshrl.u32 %v401, 7
    %v403 = vsub.s32 1, %v402
    %v404 = vrot.slane %v126, %v403
    %v405 = vlaneseq
    %v406 = vshrl.u32 %v405, 7
    %v407 = vsub.s32 2, %v406
    %v408 = vrot.slane %v126, %v407
    %v409 = vlaneseq
    %v410 = vshrl.u32 %v409, 7
    %v411 = vsub.s32 3, %v410
    %v412 = vrot.slane %v126, %v411
    %v413 = vlaneseq
    %v414 = vshrl.u32 %v413, 7
    %v415 = vsub.s32 4, %v414
    %v416 = vrot.slane %v126, %v415
    %v417 = vlaneseq
    %v418 = vshrl.u32 %v417, 7
    %v419 = vsub.s32 5, %v418
    %v420 = vrot.slane %v126, %v419
    %v421 = vlaneseq
    %v422 = vshrl.u32 %v421, 7
    %v423 = vsub.s32 6, %v422
    %v424 = vrot.slane %v126, %v423
    %v425 = vlaneseq
    %v426 = vshrl.u32 %v425, 7
    %v427 = vsub.s32 7, %v426
    %v428 = vrot.slane %v126, %v427
    %v429 = vlaneseq
    %v430 = vshrl.u32 %v429, 7
    %v431 = vsub.s32 0, %v430
    %v432 = vrot.slane %v129, %v431
    %v433 = vlaneseq
    %v434 = vshrl.u32 %v433, 7
    %v435 = vsub.s32 1, %v434
    %v436 = vrot.slane %v129, %v435
    %v437 = vlaneseq
    %v438 = vshrl.u32 %v437, 7
    %v439 = vsub.s32 2, %v438
    %v440 = vrot.slane %v129, %v439
    %v441 = vlaneseq
    %v442 = vshrl.u32 %v441, 7
    %v443 = vsub.s32 3, %v442
    %v444 = vrot.slane %v129, %v443
    %v445 = vlaneseq
    %v446 = vshrl.u32 %v445, 7
    %v447 = vsub.s32 4, %v446
    %v448 = vrot.slane %v129, %v447
    %v449 = vlaneseq
    %v450 = vshrl.u32 %v449, 7
    %v451 = vsub.s32 5, %v450
    %v452 = vrot.slane %v129, %v451
    %v453 = vlaneseq
    %v454 = vshrl.u32 %v453, 7
    %v455 = vsub.s32 6, %v454
    %v456 = vrot.slane %v129, %v455
    %v457 = vlaneseq
    %v458 = vshrl.u32 %v457, 7
    %v459 = vsub.s32 7, %v458
    %v460 = vrot.slane %v129, %v459
    %v461 = vlaneseq
    %v462 = vshrl.u32 %v461, 7
    %v463 = vsub.s32 0, %v462
    %v464 = vrot.slane %v132, %v463
    %v465 = vlaneseq
    %v466 = vshrl.u32 %v465, 7
    %v467 = vsub.s32 1, %v466
    %v468 = vrot.slane %v132, %v467
    %v469 = vlaneseq
    %v470 = vshrl.u32 %v469, 7
    %v471 = vsub.s32 2, %v470
    %v472 = vrot.slane %v132, %v471
    %v473 = vlaneseq
    %v474 = vshrl.u32 %v473, 7
    %v475 = vsub.s32 3, %v474
    %v476 = vrot.slane %v132, %v475
    %v477 = vlaneseq
    %v478 = vshrl.u32 %v477, 7
    %v479 = vsub.s32 4, %v478
    %v480 = vrot.slane %v132, %v479
    %v481 = vlaneseq
    %v482 = vshrl.u32 %v481, 7
    %v483 = vsub.s32 5, %v482
    %v484 = vrot.slane %v132, %v483
    %v485 = vlaneseq
    %v486 = vshrl.u32 %v485, 7
    %v487 = vsub.s32 6, %v486
    %v488 = vrot.slane %v132, %v487
    %v489 = vlaneseq
    %v490 = vshrl.u32 %v489, 7
    %v491 = vsub.s32 7, %v490
    %v492 = vrot.slane %v132, %v491
    %v493 = vlaneseq
    %v494 = vshrl.u32 %v493, 7
    %v495 = vsub.s32 0, %v494
    %v496 = vrot.slane %v135, %v495
    %v497 = vlaneseq
    %v498 = vshrl.u32 %v497, 7
    %v499 = vsub.s32 1, %v498
    %v500 = vrot.slane %v135, %v499
    %v501 = vlaneseq
    %v502 = vshrl.u32 %v501, 7
    %v503 = vsub.s32 2, %v502
    %v504 = vrot.slane %v135, %v503
    %v505 = vlaneseq
    %v506 = vshrl.u32 %v505, 7
    %v507 = vsub.s32 3, %v506
    %v508 = vrot.slane %v135, %v507
    %v509 = vlaneseq
    %v510 = vshrl.u32 %v509, 7
    %v511 = vsub.s32 4, %v510
    %v512 = vrot.slane %v135, %v511
    %v513 = vlaneseq
    %v514 = vshrl.u32 %v513, 7
    %v515 = vsub.s32 5, %v514
    %v516 = vrot.slane %v135, %v515
    %v517 = vlaneseq
    %v518 = vshrl.u32 %v517, 7
    %v519 = vsub.s32 6, %v518
    %v520 = vrot.slane %v135, %v519
    %v521 = vlaneseq
    %v522 = vshrl.u32 %v521, 7
    %v523 = vsub.s32 7, %v522
    %v524 = vrot.slane %v135, %v523
    %v525 = vlaneseq
    %v526 = vshrl.u32 %v525, 7
    %v527 = vsub.s32 0, %v526
    %v528 = vrot.slane %v138, %v527
    %v529 = vlaneseq
    %v530 = vshrl.u32 %v529, 7
    %v531 = vsub.s32 1, %v530
    %v532 = vrot.slane %v138, %v531
    %v533 = vlaneseq
    %v534 = vshrl.u32 %v533, 7
    %v535 = vsub.s32 2, %v534
    %v536 = vrot.slane %v138, %v535
    %v537 = vlaneseq
    %v538 = vshrl.u32 %v537, 7
    %v539 = vsub.s32 3, %v538
    %v540 = vrot.slane %v138, %v539
    %v541 = vlaneseq
    %v542 = vshrl.u32 %v541, 7
    %v543 = vsub.s32 4, %v542
    %v544 = vrot.slane %v138, %v543
    %v545 = vlaneseq
    %v546 = vshrl.u32 %v545, 7
    %v547 = vsub.s32 5, %v546
    %v548 = vrot.slane %v138, %v547
    %v549 = vlaneseq
    %v550 = vshrl.u32 %v549, 7
    %v551 = vsub.s32 6, %v550
    %v552 = vrot.slane %v138, %v551
    %v553 = vlaneseq
    %v554 = vshrl.u32 %v553, 7
    %v555 = vsub.s32 7, %v554
    %v556 = vrot.slane %v138, %v555
    %v557 = vlaneseq
    %v558 = vshrl.u32 %v557, 7
    %v559 = vsub.s32 0, %v558
    %v560 = vrot.slane %v141, %v559
    %v561 = vlaneseq
    %v562 = vshrl.u32 %v561, 7
    %v563 = vsub.s32 1, %v562
    %v564 = vrot.slane %v141, %v563
    %v565 = vlaneseq
    %v566 = vshrl.u32 %v565, 7
    %v567 = vsub.s32 2, %v566
    %v568 = vrot.slane %v141, %v567
    %v569 = vlaneseq
    %v570 = vshrl.u32 %v569, 7
    %v571 = vsub.s32 3, %v570
    %v572 = vrot.slane %v141, %v571
    %v573 = vlaneseq
    %v574 = vshrl.u32 %v573, 7
    %v575 = vsub.s32 4, %v574
    %v576 = vrot.slane %v141, %v575
    %v577 = vlaneseq
    %v578 = vshrl.u32 %v577, 7
    %v579 = vsub.s32 5, %v578
    %v580 = vrot.slane %v141, %v579
    %v581 = vlaneseq
    %v582 = vshrl.u32 %v581, 7
    %v583 = vsub.s32 6, %v582
    %v584 = vrot.slane %v141, %v583
    %v585 = vlaneseq
    %v586 = vshrl.u32 %v585, 7
    %v587 = vsub.s32 7, %v586
    %v588 = vrot.slane %v141, %v587
    %v589 = vlaneseq
    %v590 = vshrl.u32 %v589, 7
    %v591 = vsub.s32 0, %v590
    %v592 = vrot.slane %v144, %v591
    %v593 = vlaneseq
    %v594 = vshrl.u32 %v593, 7
    %v595 = vsub.s32 1, %v594
    %v596 = vrot.slane %v144, %v595
    %v597 = vlaneseq
    %v598 = vshrl.u32 %v597, 7
    %v599 = vsub.s32 2, %v598
    %v600 = vrot.slane %v144, %v599
    %v601 = vlaneseq
    %v602 = vshrl.u32 %v601, 7
    %v603 = vsub.s32 3, %v602
    %v604 = vrot.slane %v144, %v603
    %v605 = vlaneseq
    %v606 = vshrl.u32 %v605, 7
    %v607 = vsub.s32 4, %v606
    %v608 = vrot.slane %v144, %v607
    %v609 = vlaneseq
    %v610 = vshrl.u32 %v609, 7
    %v611 = vsub.s32 5, %v610
    %v612 = vrot.slane %v144, %v611
    %v613 = vlaneseq
    %v614 = vshrl.u32 %v613, 7
    %v615 = vsub.s32 6, %v614
    %v616 = vrot.slane %v144, %v615
    %v617 = vlaneseq
    %v618 = vshrl.u32 %v617, 7
    %v619 = vsub.s32 7, %v618
    %v620 = vrot.slane %v144, %v619
    %v621 = vlaneseq
    %v622 = vshrl.u32 %v621, 7
    %v623 = vsub.s32 0, %v622
    %v624 = vrot.slane %v147, %v623
    %v625 = vlaneseq
    %v626 = vshrl.u32 %v625, 7
    %v627 = vsub.s32 1, %v626
    %v628 = vrot.slane %v147, %v627
    %v629 = vlaneseq
    %v630 = vshrl.u32 %v629, 7
    %v631 = vsub.s32 2, %v630
    %v632 = vrot.slane %v147, %v631
    %v633 = vlaneseq
    %v634 = vshrl.u32 %v633, 7
    %v635 = vsub.s32 3, %v634
    %v636 = vrot.slane %v147, %v635
    %v637 = vlaneseq
    %v638 = vshrl.u32 %v637, 7
    %v639 = vsub.s32 4, %v638
    %v640 = vrot.slane %v147, %v639
    %v641 = vlaneseq
    %v642 = vshrl.u32 %v641, 7
    %v643 = vsub.s32 5, %v642
    %v644 = vrot.slane %v147, %v643
    %v645 = vlaneseq
    %v646 = vshrl.u32 %v645, 7
    %v647 = vsub.s32 6, %v646
    %v648 = vrot.slane %v147, %v647
    %v649 = vlaneseq
    %v650 = vshrl.u32 %v649, 7
    %v651 = vsub.s32 7, %v650
    %v652 = vrot.slane %v147, %v651
    %v653 = vlaneseq
    %v654 = vshrl.u32 %v653, 7
    %v655 = vsub.s32 0, %v654
    %v656 = vrot.slane %v150, %v655
    %v657 = vlaneseq
    %v658 = vshrl.u32 %v657, 7
    %v659 = vsub.s32 1, %v658
    %v660 = vrot.slane %v150, %v659
    %v661 = vlaneseq
    %v662 = vshrl.u32 %v661, 7
    %v663 = vsub.s32 2, %v662
    %v664 = vrot.slane %v150, %v663
    %v665 = vlaneseq
    %v666 = vshrl.u32 %v665, 7
    %v667 = vsub.s32 3, %v666
    %v668 = vrot.slane %v150, %v667
    %v669 = vlaneseq
    %v670 = vshrl.u32 %v669, 7
    %v671 = vsub.s32 4, %v670
    %v672 = vrot.slane %v150, %v671
    %v673 = vlaneseq
    %v674 = vshrl.u32 %v673, 7
    %v675 = vsub.s32 5, %v674
    %v676 = vrot.slane %v150, %v675
    %v677 = vlaneseq
    %v678 = vshrl.u32 %v677, 7
    %v679 = vsub.s32 6, %v678
    %v680 = vrot.slane %v150, %v679
    %v681 = vlaneseq
    %v682 = vshrl.u32 %v681, 7
    %v683 = vsub.s32 7, %v682
    %v684 = vrot.slane %v150, %v683
    %v685 = vlaneseq
    %v686 = vshrl.u32 %v685, 7
    %v687 = vsub.s32 0, %v686
    %v688 = vrot.slane %v153, %v687
    %v689 = vlaneseq
    %v690 = vshrl.u32 %v689, 7
    %v691 = vsub.s32 1, %v690
    %v692 = vrot.slane %v153, %v691
    %v693 = vlaneseq
    %v694 = vshrl.u32 %v693, 7
    %v695 = vsub.s32 2, %v694
    %v696 = vrot.slane %v153, %v695
    %v697 = vlaneseq
    %v698 = vshrl.u32 %v697, 7
    %v699 = vsub.s32 3, %v698
    %v700 = vrot.slane %v153, %v699
    %v701 = vlaneseq
    %v702 = vshrl.u32 %v701, 7
    %v703 = vsub.s32 4, %v702
    %v704 = vrot.slane %v153, %v703
    %v705 = vlaneseq
    %v706 = vshrl.u32 %v705, 7
    %v707 = vsub.s32 5, %v706
    %v708 = vrot.slane %v153, %v707
    %v709 = vlaneseq
    %v710 = vshrl.u32 %v709, 7
    %v711 = vsub.s32 6, %v710
    %v712 = vrot.slane %v153, %v711
    %v713 = vlaneseq
    %v714 = vshrl.u32 %v713, 7
    %v715 = vsub.s32 7, %v714
    %v716 = vrot.slane %v153, %v715
    %v717 = vlaneseq
    %v718 = vshrl.u32 %v717, 7
    %v719 = vsub.s32 0, %v718
    %v720 = vrot.slane %v156, %v719
    %v721 = vlaneseq
    %v722 = vshrl.u32 %v721, 7
    %v723 = vsub.s32 1, %v722
    %v724 = vrot.slane %v156, %v723
    %v725 = vlaneseq
    %v726 = vshrl.u32 %v725, 7
    %v727 = vsub.s32 2, %v726
    %v728 = vrot.slane %v156, %v727
    %v729 = vlaneseq
    %v730 = vshrl.u32 %v729, 7
    %v731 = vsub.s32 3, %v730
    %v732 = vrot.slane %v156, %v731
    %v733 = vlaneseq
    %v734 = vshrl.u32 %v733, 7
    %v735 = vsub.s32 4, %v734
    %v736 = vrot.slane %v156, %v735
    %v737 = vlaneseq
    %v738 = vshrl.u32 %v737, 7
    %v739 = vsub.s32 5, %v738
    %v740 = vrot.slane %v156, %v739
    %v741 = vlaneseq
    %v742 = vshrl.u32 %v741, 7
    %v743 = vsub.s32 6, %v742
    %v744 = vrot.slane %v156, %v743
    %v745 = vlaneseq
    %v746 = vshrl.u32 %v745, 7
    %v747 = vsub.s32 7, %v746
    %v748 = vrot.slane %v156, %v747
    %v749 = vlaneseq
    %v750 = vshrl.u32 %v749, 7
    %v751 = vsub.s32 0, %v750
    %v752 = vrot.slane %v159, %v751
    %v753 = vlaneseq
    %v754 = vshrl.u32 %v753, 7
    %v755 = vsub.s32 1, %v754
    %v756 = vrot.slane %v159, %v755
    %v757 = vlaneseq
    %v758 = vshrl.u32 %v757, 7
    %v759 = vsub.s32 2, %v758
    %v760 = vrot.slane %v159, %v759
    %v761 = vlaneseq
    %v762 = vshrl.u32 %v761, 7
    %v763 = vsub.s32 3, %v762
    %v764 = vrot.slane %v159, %v763
    %v765 = vlaneseq
    %v766 = vshrl.u32 %v765, 7
    %v767 = vsub.s32 4, %v766
    %v768 = vrot.slane %v159, %v767
    %v769 = vlaneseq
    %v770 = vshrl.u32 %v769, 7
    %v771 = vsub.s32 5, %v770
    %v772 = vrot.slane %v159, %v771
    %v773 = vlaneseq
    %v774 = vshrl.u32 %v773, 7
    %v775 = vsub.s32 6, %v774
    %v776 = vrot.slane %v159, %v775
    %v777 = vlaneseq
    %v778 = vshrl.u32 %v777, 7
    %v779 = vsub.s32 7, %v778
    %v780 = vrot.slane %v159, %v779
    %v781 = vlaneseq
    %v782 = vshrl.u32 %v781, 7
    %v783 = vsub.s32 0, %v782
    %v784 = vrot.slane %v162, %v783
    %v785 = vlaneseq
    %v786 = vshrl.u32 %v785, 7
    %v787 = vsub.s32 1, %v786
    %v788 = vrot.slane %v162, %v787
    %v789 = vlaneseq
    %v790 = vshrl.u32 %v789, 7
    %v791 = vsub.s32 2, %v790
    %v792 = vrot.slane %v162, %v791
    %v793 = vlaneseq
    %v794 = vshrl.u32 %v793, 7
    %v795 = vsub.s32 3, %v794
    %v796 = vrot.slane %v162, %v795
    %v797 = vlaneseq
    %v798 = vshrl.u32 %v797, 7
    %v799 = vsub.s32 4, %v798
    %v800 = vrot.slane %v162, %v799
    %v801 = vlaneseq
    %v802 = vshrl.u32 %v801, 7
    %v803 = vsub.s32 5, %v802
    %v804 = vrot.slane %v162, %v803
    %v805 = vlaneseq
    %v806 = vshrl.u32 %v805, 7
    %v807 = vsub.s32 6, %v806
    %v808 = vrot.slane %v162, %v807
    %v809 = vlaneseq
    %v810 = vshrl.u32 %v809, 7
    %v811 = vsub.s32 7, %v810
    %v812 = vrot.slane %v162, %v811
    %v813 = vlaneseq
    %v814 = vshrl.u32 %v813, 7
    %v815 = vsub.s32 0, %v814
    %v816 = vrot.slane %v165, %v815
    %v817 = vlaneseq
    %v818 = vshrl.u32 %v817, 7
    %v819 = vsub.s32 1, %v818
    %v820 = vrot.slane %v165, %v819
    %v821 = vlaneseq
    %v822 = vshrl.u32 %v821, 7
    %v823 = vsub.s32 2, %v822
    %v824 = vrot.slane %v165, %v823
    %v825 = vlaneseq
    %v826 = vshrl.u32 %v825, 7
    %v827 = vsub.s32 3, %v826
    %v828 = vrot.slane %v165, %v827
    %v829 = vlaneseq
    %v830 = vshrl.u32 %v829, 7
    %v831 = vsub.s32 4, %v830
    %v832 = vrot.slane %v165, %v831
    %v833 = vlaneseq
    %v834 = vshrl.u32 %v833, 7
    %v835 = vsub.s32 5, %v834
    %v836 = vrot.slane %v165, %v835
    %v837 = vlaneseq
    %v838 = vshrl.u32 %v837, 7
    %v839 = vsub.s32 6, %v838
    %v840 = vrot.slane %v165, %v839
    %v841 = vlaneseq
    %v842 = vshrl.u32 %v841, 7
    %v843 = vsub.s32 7, %v842
    %v844 = vrot.slane %v165, %v843
    %v845 = vlaneseq
    %v846 = vshrl.u32 %v845, 7
    %v847 = vsub.s32 0, %v846
    %v848 = vrot.slane %v168, %v847
    %v849 = vlaneseq
    %v850 = vshrl.u32 %v849, 7
    %v851 = vsub.s32 1, %v850
    %v852 = vrot.slane %v168, %v851
    %v853 = vlaneseq
    %v854 = vshrl.u32 %v853, 7
    %v855 = vsub.s32 2, %v854
    %v856 = vrot.slane %v168, %v855
    %v857 = vlaneseq
    %v858 = vshrl.u32 %v857, 7
    %v859 = vsub.s32 3, %v858
    %v860 = vrot.slane %v168, %v859
    %v861 = vlaneseq
    %v862 = vshrl.u32 %v861, 7
    %v863 = vsub.s32 4, %v862
    %v864 = vrot.slane %v168, %v863
    %v865 = vlaneseq
    %v866 = vshrl.u32 %v865, 7
    %v867 = vsub.s32 5, %v866
    %v868 = vrot.slane %v168, %v867
    %v869 = vlaneseq
    %v870 = vshrl.u32 %v869, 7
    %v871 = vsub.s32 6, %v870
    %v872 = vrot.slane %v168, %v871
    %v873 = vlaneseq
    %v874 = vshrl.u32 %v873, 7
    %v875 = vsub.s32 7, %v874
    %v876 = vrot.slane %v168, %v875
    %v877 = vlaneseq
    %v878 = vshrl.u32 %v877, 7
    %v879 = vsub.s32 0, %v878
    %v880 = vrot.slane %v171, %v879
    %v881 = vlaneseq
    %v882 = vshrl.u32 %v881, 7
    %v883 = vsub.s32 1, %v882
    %v884 = vrot.slane %v171, %v883
    %v885 = vlaneseq
    %v886 = vshrl.u32 %v885, 7
    %v887 = vsub.s32 2, %v886
    %v888 = vrot.slane %v171, %v887
    %v889 = vlaneseq
    %v890 = vshrl.u32 %v889, 7
    %v891 = vsub.s32 3, %v890
    %v892 = vrot.slane %v171, %v891
    %v893 = vlaneseq
    %v894 = vshrl.u32 %v893, 7
    %v895 = vsub.s32 4, %v894
    %v896 = vrot.slane %v171, %v895
    %v897 = vlaneseq
    %v898 = vshrl.u32 %v897, 7
    %v899 = vsub.s32 5, %v898
    %v900 = vrot.slane %v171, %v899
    %v901 = vlaneseq
    %v902 = vshrl.u32 %v901, 7
    %v903 = vsub.s32 6, %v902
    %v904 = vrot.slane %v171, %v903
    %v905 = vlaneseq
    %v906 = vshrl.u32 %v905, 7
    %v907 = vsub.s32 7, %v906
    %v908 = vrot.slane %v171, %v907
    %v909 = vlaneseq
    %v910 = vshrl.u32 %v909, 7
    %v911 = vsub.s32 0, %v910
    %v912 = vrot.slane %v174, %v911
    %v913 = vlaneseq
    %v914 = vshrl.u32 %v913, 7
    %v915 = vsub.s32 1, %v914
    %v916 = vrot.slane %v174, %v915
    %v917 = vlaneseq
    %v918 = vshrl.u32 %v917, 7
    %v919 = vsub.s32 2, %v918
    %v920 = vrot.slane %v174, %v919
    %v921 = vlaneseq
    %v922 = vshrl.u32 %v921, 7
    %v923 = vsub.s32 3, %v922
    %v924 = vrot.slane %v174, %v923
    %v925 = vlaneseq
    %v926 = vshrl.u32 %v925, 7
    %v927 = vsub.s32 4, %v926
    %v928 = vrot.slane %v174, %v927
    %v929 = vlaneseq
    %v930 = vshrl.u32 %v929, 7
    %v931 = vsub.s32 5, %v930
    %v932 = vrot.slane %v174, %v931
    %v933 = vlaneseq
    %v934 = vshrl.u32 %v933, 7
    %v935 = vsub.s32 6, %v934
    %v936 = vrot.slane %v174, %v935
    %v937 = vlaneseq
    %v938 = vshrl.u32 %v937, 7
    %v939 = vsub.s32 7, %v938
    %v940 = vrot.slane %v174, %v939
    %v941 = vlaneseq
    %v942 = vshrl.u32 %v941, 7
    %v943 = vsub.s32 0, %v942
    %v944 = vrot.slane %v177, %v943
    %v945 = vlaneseq
    %v946 = vshrl.u32 %v945, 7
    %v947 = vsub.s32 1, %v946
    %v948 = vrot.slane %v177, %v947
    %v949 = vlaneseq
    %v950 = vshrl.u32 %v949, 7
    %v951 = vsub.s32 2, %v950
    %v952 = vrot.slane %v177, %v951
    %v953 = vlaneseq
    %v954 = vshrl.u32 %v953, 7
    %v955 = vsub.s32 3, %v954
    %v956 = vrot.slane %v177, %v955
    %v957 = vlaneseq
    %v958 = vshrl.u32 %v957, 7
    %v959 = vsub.s32 4, %v958
    %v960 = vrot.slane %v177, %v959
    %v961 = vlaneseq
    %v962 = vshrl.u32 %v961, 7
    %v963 = vsub.s32 5, %v962
    %v964 = vrot.slane %v177, %v963
    %v965 = vlaneseq
    %v966 = vshrl.u32 %v965, 7
    %v967 = vsub.s32 6, %v966
    %v968 = vrot.slane %v177, %v967
    %v969 = vlaneseq
    %v970 = vshrl.u32 %v969, 7
    %v971 = vsub.s32 7, %v970
    %v972 = vrot.slane %v177, %v971
    %v973 = vlaneseq
    %v974 = vshrl.u32 %v973, 7
    %v975 = vsub.s32 0, %v974
    %v976 = vrot.slane %v180, %v975
    %v977 = vlaneseq
    %v978 = vshrl.u32 %v977, 7
    %v979 = vsub.s32 1, %v978
    %v980 = vrot.slane %v180, %v979
    %v981 = vlaneseq
    %v982 = vshrl.u32 %v981, 7
    %v983 = vsub.s32 2, %v982
    %v984 = vrot.slane %v180, %v983
    %v985 = vlaneseq
    %v986 = vshrl.u32 %v985, 7
    %v987 = vsub.s32 3, %v986
    %v988 = vrot.slane %v180, %v987
    %v989 = vlaneseq
    %v990 = vshrl.u32 %v989, 7
    %v991 = vsub.s32 4, %v990
    %v992 = vrot.slane %v180, %v991
    %v993 = vlaneseq
    %v994 = vshrl.u32 %v993, 7
    %v995 = vsub.s32 5, %v994
    %v996 = vrot.slane %v180, %v995
    %v997 = vlaneseq
    %v998 = vshrl.u32 %v997, 7
    %v999 = vsub.s32 6, %v998
    %v1000 = vrot.slane %v180, %v999
    %v1001 = vlaneseq
    %v1002 = vshrl.u32 %v1001, 7
    %v1003 = vsub.s32 7, %v1002
    %v1004 = vrot.slane %v180, %v1003
    %v1005 = vlaneseq
    %v1006 = vshrl.u32 %v1005, 7
    %v1007 = vsub.s32 0, %v1006
    %v1008 = vrot.slane %v183, %v1007
    %v1009 = vlaneseq
    %v1010 = vshrl.u32 %v1009, 7
    %v1011 = vsub.s32 1, %v1010
    %v1012 = vrot.slane %v183, %v1011
    %v1013 = vlaneseq
    %v1014 = vshrl.u32 %v1013, 7
    %v1015 = vsub.s32 2, %v1014
    %v1016 = vrot.slane %v183, %v1015
    %v1017 = vlaneseq
    %v1018 = vshrl.u32 %v1017, 7
    %v1019 = vsub.s32 3, %v1018
    %v1020 = vrot.slane %v183, %v1019
    %v1021 = vlaneseq
    %v1022 = vshrl.u32 %v1021, 7
    %v1023 = vsub.s32 4, %v1022
    %v1024 = vrot.slane %v183, %v1023
    %v1025 = vlaneseq
    %v1026 = vshrl.u32 %v1025, 7
    %v1027 = vsub.s32 5, %v1026
    %v1028 = vrot.slane %v183, %v1027
    %v1029 = vlaneseq
    %v1030 = vshrl.u32 %v1029, 7
    %v1031 = vsub.s32 6, %v1030
    %v1032 = vrot.slane %v183, %v1031
    %v1033 = vlaneseq
    %v1034 = vshrl.u32 %v1033, 7
    %v1035 = vsub.s32 7, %v1034
    %v1036 = vrot.slane %v183, %v1035
    %v1037 = vlaneseq
    %v1038 = vshrl.u32 %v1037, 7
    %v1039 = vsub.s32 0, %v1038
    %v1040 = vrot.slane %v186, %v1039
    %v1041 = vlaneseq
    %v1042 = vshrl.u32 %v1041, 7
    %v1043 = vsub.s32 1, %v1042
    %v1044 = vrot.slane %v186, %v1043
    %v1045 = vlaneseq
    %v1046 = vshrl.u32 %v1045, 7
    %v1047 = vsub.s32 2, %v1046
    %v1048 = vrot.slane %v186, %v1047
    %v1049 = vlaneseq
    %v1050 = vshrl.u32 %v1049, 7
    %v1051 = vsub.s32 3, %v1050
    %v1052 = vrot.slane %v186, %v1051
    %v1053 = vlaneseq
    %v1054 = vshrl.u32 %v1053, 7
    %v1055 = vsub.s32 4, %v1054
    %v1056 = vrot.slane %v186, %v1055
    %v1057 = vlaneseq
    %v1058 = vshrl.u32 %v1057, 7
    %v1059 = vsub.s32 5, %v1058
    %v1060 = vrot.slane %v186, %v1059
    %v1061 = vlaneseq
    %v1062 = vshrl.u32 %v1061, 7
    %v1063 = vsub.s32 6, %v1062
    %v1064 = vrot.slane %v186, %v1063
    %v1065 = vlaneseq
    %v1066 = vshrl.u32 %v1065, 7
    %v1067 = vsub.s32 7, %v1066
    %v1068 = vrot.slane %v186, %v1067
    %v1069 = vlaneseq
    %v1070 = vshrl.u32 %v1069, 7
    %v1071 = vsub.s32 0, %v1070
    %v1072 = vrot.slane %v189, %v1071
    %v1073 = vlaneseq
    %v1074 = vshrl.u32 %v1073, 7
    %v1075 = vsub.s32 1, %v1074
    %v1076 = vrot.slane %v189, %v1075
    %v1077 = vlaneseq
    %v1078 = vshrl.u32 %v1077, 7
    %v1079 = vsub.s32 2, %v1078
    %v1080 = vrot.slane %v189, %v1079
    %v1081 = vlaneseq
    %v1082 = vshrl.u32 %v1081, 7
    %v1083 = vsub.s32 3, %v1082
    %v1084 = vrot.slane %v189, %v1083
    %v1085 = vlaneseq
    %v1086 = vshrl.u32 %v1085, 7
    %v1087 = vsub.s32 4, %v1086
    %v1088 = vrot.slane %v189, %v1087
    %v1089 = vlaneseq
    %v1090 = vshrl.u32 %v1089, 7
    %v1091 = vsub.s32 5, %v1090
    %v1092 = vrot.slane %v189, %v1091
    %v1093 = vlaneseq
    %v1094 = vshrl.u32 %v1093, 7
    %v1095 = vsub.s32 6, %v1094
    %v1096 = vrot.slane %v189, %v1095
    %v1097 = vlaneseq
    %v1098 = vshrl.u32 %v1097, 7
    %v1099 = vsub.s32 7, %v1098
    %v1100 = vrot.slane %v189, %v1099
    %v1101 = vlaneseq
    %v1102 = vshrl.u32 %v1101, 7
    %v1103 = vsub.s32 0, %v1102
    %v1104 = vrot.slane %v192, %v1103
    %v1105 = vlaneseq
    %v1106 = vshrl.u32 %v1105, 7
    %v1107 = vsub.s32 1, %v1106
    %v1108 = vrot.slane %v192, %v1107
    %v1109 = vlaneseq
    %v1110 = vshrl.u32 %v1109, 7
    %v1111 = vsub.s32 2, %v1110
    %v1112 = vrot.slane %v192, %v1111
    %v1113 = vlaneseq
    %v1114 = vshrl.u32 %v1113, 7
    %v1115 = vsub.s32 3, %v1114
    %v1116 = vrot.slane %v192, %v1115
    %v1117 = vlaneseq
    %v1118 = vshrl.u32 %v1117, 7
    %v1119 = vsub.s32 4, %v1118
    %v1120 = vrot.slane %v192, %v1119
    %v1121 = vlaneseq
    %v1122 = vshrl.u32 %v1121, 7
    %v1123 = vsub.s32 5, %v1122
    %v1124 = vrot.slane %v192, %v1123
    %v1125 = vlaneseq
    %v1126 = vshrl.u32 %v1125, 7
    %v1127 = vsub.s32 6, %v1126
    %v1128 = vrot.slane %v192, %v1127
    %v1129 = vlaneseq
    %v1130 = vshrl.u32 %v1129, 7
    %v1131 = vsub.s32 7, %v1130
    %v1132 = vrot.slane %v192, %v1131
    %v1133 = vlaneseq
    %v1134 = vshrl.u32 %v1133, 7
    %v1135 = vsub.s32 0, %v1134
    %v1136 = vrot.slane %v195, %v1135
    %v1137 = vlaneseq
    %v1138 = vshrl.u32 %v1137, 7
    %v1139 = vsub.s32 1, %v1138
    %v1140 = vrot.slane %v195, %v1139
    %v1141 = vlaneseq
    %v1142 = vshrl.u32 %v1141, 7
    %v1143 = vsub.s32 2, %v1142
    %v1144 = vrot.slane %v195, %v1143
    %v1145 = vlaneseq
    %v1146 = vshrl.u32 %v1145, 7
    %v1147 = vsub.s32 3, %v1146
    %v1148 = vrot.slane %v195, %v1147
    %v1149 = vlaneseq
    %v1150 = vshrl.u32 %v1149, 7
    %v1151 = vsub.s32 4, %v1150
    %v1152 = vrot.slane %v195, %v1151
    %v1153 = vlaneseq
    %v1154 = vshrl.u32 %v1153, 7
    %v1155 = vsub.s32 5, %v1154
    %v1156 = vrot.slane %v195, %v1155
    %v1157 = vlaneseq
    %v1158 = vshrl.u32 %v1157, 7
    %v1159 = vsub.s32 6, %v1158
    %v1160 = vrot.slane %v195, %v1159
    %v1161 = vlaneseq
    %v1162 = vshrl.u32 %v1161, 7
    %v1163 = vsub.s32 7, %v1162
    %v1164 = vrot.slane %v195, %v1163
    %v1165 = vlaneseq
    %v1166 = vshrl.u32 %v1165, 7
    %v1167 = vsub.s32 0, %v1166
    %v1168 = vrot.slane %v198, %v1167
    %v1169 = vlaneseq
    %v1170 = vshrl.u32 %v1169, 7
    %v1171 = vsub.s32 1, %v1170
    %v1172 = vrot.slane %v198, %v1171
    %v1173 = vlaneseq
    %v1174 = vshrl.u32 %v1173, 7
    %v1175 = vsub.s32 2, %v1174
    %v1176 = vrot.slane %v198, %v1175
    %v1177 = vlaneseq
    %v1178 = vshrl.u32 %v1177, 7
    %v1179 = vsub.s32 3, %v1178
    %v1180 = vrot.slane %v198, %v1179
    %v1181 = vlaneseq
    %v1182 = vshrl.u32 %v1181, 7
    %v1183 = vsub.s32 4, %v1182
    %v1184 = vrot.slane %v198, %v1183
    %v1185 = vlaneseq
    %v1186 = vshrl.u32 %v1185, 7
    %v1187 = vsub.s32 5, %v1186
    %v1188 = vrot.slane %v198, %v1187
    %v1189 = vlaneseq
    %v1190 = vshrl.u32 %v1189, 7
    %v1191 = vsub.s32 6, %v1190
    %v1192 = vrot.slane %v198, %v1191
    %v1193 = vlaneseq
    %v1194 = vshrl.u32 %v1193, 7
    %v1195 = vsub.s32 7, %v1194
    %v1196 = vrot.slane %v198, %v1195
    %v1197 = vlaneseq
    %v1198 = vshrl.u32 %v1197, 7
    %v1199 = vsub.s32 0, %v1198
    %v1200 = vrot.slane %v201, %v1199
    %v1201 = vlaneseq
    %v1202 = vshrl.u32 %v1201, 7
    %v1203 = vsub.s32 1, %v1202
    %v1204 = vrot.slane %v201, %v1203
    %v1205 = vlaneseq
    %v1206 = vshrl.u32 %v1205, 7
    %v1207 = vsub.s32 2, %v1206
    %v1208 = vrot.slane %v201, %v1207
    %v1209 = vlaneseq
    %v1210 = vshrl.u32 %v1209, 7
    %v1211 = vsub.s32 3, %v1210
    %v1212 = vrot.slane %v201, %v1211
    %v1213 = vlaneseq
    %v1214 = vshrl.u32 %v1213, 7
    %v1215 = vsub.s32 4, %v1214
    %v1216 = vrot.slane %v201, %v1215
    %v1217 = vlaneseq
    %v1218 = vshrl.u32 %v1217, 7
    %v1219 = vsub.s32 5, %v1218
    %v1220 = vrot.slane %v201, %v1219
    %v1221 = vlaneseq
    %v1222 = vshrl.u32 %v1221, 7
    %v1223 = vsub.s32 6, %v1222
    %v1224 = vrot.slane %v201, %v1223
    %v1225 = vlaneseq
    %v1226 = vshrl.u32 %v1225, 7
    %v1227 = vsub.s32 7, %v1226
    %v1228 = vrot.slane %v201, %v1227
    %v1229 = vlaneseq
    %v1230 = vshrl.u32 %v1229, 7
    %v1231 = vsub.s32 0, %v1230
    %v1232 = vrot.slane %v204, %v1231
    %v1233 = vlaneseq
    %v1234 = vshrl.u32 %v1233, 7
    %v1235 = vsub.s32 1, %v1234
    %v1236 = vrot.slane %v204, %v1235
    %v1237 = vlaneseq
    %v1238 = vshrl.u32 %v1237, 7
    %v1239 = vsub.s32 2, %v1238
    %v1240 = vrot.slane %v204, %v1239
    %v1241 = vlaneseq
    %v1242 = vshrl.u32 %v1241, 7
    %v1243 = vsub.s32 3, %v1242
    %v1244 = vrot.slane %v204, %v1243
    %v1245 = vlaneseq
    %v1246 = vshrl.u32 %v1245, 7
    %v1247 = vsub.s32 4, %v1246
    %v1248 = vrot.slane %v204, %v1247
    %v1249 = vlaneseq
    %v1250 = vshrl.u32 %v1249, 7
    %v1251 = vsub.s32 5, %v1250
    %v1252 = vrot.slane %v204, %v1251
    %v1253 = vlaneseq
    %v1254 = vshrl.u32 %v1253, 7
    %v1255 = vsub.s32 6, %v1254
    %v1256 = vrot.slane %v204, %v1255
    %v1257 = vlaneseq
    %v1258 = vshrl.u32 %v1257, 7
    %v1259 = vsub.s32 7, %v1258
    %v1260 = vrot.slane %v204, %v1259
    %v1261 = vcombine.low %v240, %v244
    %v1262 = vcombine.low %v248, %v252
    %v1263 = vcombine.low %v256, %v260
    %v1264 = vcombine.low %v264, %v268
    %v1266 = vunpack.c.l.s4 1966171168
    %v1267 = vunpack.c.0.s8 %v1266
    %v1268 = vlaneseq
    %v1269 = vshrl.u32 %v1268, 7
    %v1270 = vsub.s32 %v1267, %v1269
    %v1271 = vrot.slane %v1261, %v1270
    %v1273 = vunpack.c.l.s4 1966171168
    %v1274 = vunpack.c.0.s8 %v1273
    %v1275 = vlaneseq
    %v1276 = vshrl.u32 %v1275, 7
    %v1277 = vsub.s32 %v1274, %v1276
    %v1278 = vrot.slane %v1262, %v1277
    %v1280 = vunpack.c.l.s4 1966171168
    %v1281 = vunpack.c.0.s8 %v1280
    %v1282 = vlaneseq
    %v1283 = vshrl.u32 %v1282, 7
    %v1284 = vsub.s32 %v1281, %v1283
    %v1285 = vrot.slane %v1263, %v1284
    %v1287 = vunpack.c.l.s4 1966171168
    %v1288 = vunpack.c.0.s8 %v1287
    %v1289 = vlaneseq
    %v1290 = vshrl.u32 %v1289, 7
    %v1291 = vsub.s32 %v1288, %v1290
    %v1292 = vrot.slane %v1264, %v1291
    %v1293 = vcombine.low %v1271, %v1278
    %v1294 = vcombine.low %v1285, %v1292
    %v1296 = vunpack.c.l.s4 1966171168
    %v1297 = vunpack.c.0.s8 %v1296
    %v1298 = vlaneseq
    %v1299 = vshrl.u32 %v1298, 7
    %v1300 = vsub.s32 %v1297, %v1299
    %v1301 = vrot.slane %v1293, %v1300
    %v1303 = vunpack.c.l.s4 1966171168
    %v1304 = vunpack.c.0.s8 %v1303
    %v1305 = vlaneseq
    %v1306 = vshrl.u32 %v1305, 7
    %v1307 = vsub.s32 %v1304, %v1306
    %v1308 = vrot.slane %v1294, %v1307
    %v1309 = vcombine.low %v1301, %v1308
    %v1310 = vcombine.low %v272, %v276
    %v1311 = vcombine.low %v280, %v284
    %v1312 = vcombine.low %v288, %v292
    %v1313 = vcombine.low %v296, %v300
    %v1315 = vunpack.c.l.s4 1966171168
    %v1316 = vunpack.c.0.s8 %v1315
    %v1317 = vlaneseq
    %v1318 = vshrl.u32 %v1317, 7
    %v1319 = vsub.s32 %v1316, %v1318
    %v1320 = vrot.slane %v1310, %v1319
    %v1322 = vunpack.c.l.s4 1966171168
    %v1323 = vunpack.c.0.s8 %v1322
    %v1324 = vlaneseq
    %v1325 = vshrl.u32 %v1324, 7
    %v1326 = vsub.s32 %v1323, %v1325
    %v1327 = vrot.slane %v1311, %v1326
    %v1329 = vunpack.c.l.s4 1966171168
    %v1330 = vunpack.c.0.s8 %v1329
    %v1331 = vlaneseq
    %v1332 = vshrl.u32 %v1331, 7
    %v1333 = vsub.s32 %v1330, %v1332
    %v1334 = vrot.slane %v1312, %v1333
    %v1336 = vunpack.c.l.s4 1966171168
    %v1337 = vunpack.c.0.s8 %v1336
    %v1338 = vlaneseq
    %v1339 = vshrl.u32 %v1338, 7
    %v1340 = vsub.s32 %v1337, %v1339
    %v1341 = vrot.slane %v1313, %v1340
    %v1342 = vcombine.low %v1320, %v1327
    %v1343 = vcombine.low %v1334, %v1341
    %v1345 = vunpack.c.l.s4 1966171168
    %v1346 = vunpack.c.0.s8 %v1345
    %v1347 = vlaneseq
    %v1348 = vshrl.u32 %v1347, 7
    %v1349 = vsub.s32 %v1346, %v1348
    %v1350 = vrot.slane %v1342, %v1349
    %v1352 = vunpack.c.l.s4 1966171168
    %v1353 = vunpack.c.0.s8 %v1352
    %v1354 = vlaneseq
    %v1355 = vshrl.u32 %v1354, 7
    %v1356 = vsub.s32 %v1353, %v1355
    %v1357 = vrot.slane %v1343, %v1356
    %v1358 = vcombine.low %v1350, %v1357
    %v1359 = vcombine.low %v304, %v308
    %v1360 = vcombine.low %v312, %v316
    %v1361 = vcombine.low %v320, %v324
    %v1362 = vcombine.low %v328, %v332
    %v1364 = vunpack.c.l.s4 1966171168
    %v1365 = vunpack.c.0.s8 %v1364
    %v1366 = vlaneseq
    %v1367 = vshrl.u32 %v1366, 7
    %v1368 = vsub.s32 %v1365, %v1367
    %v1369 = vrot.slane %v1359, %v1368
    %v1371 = vunpack.c.l.s4 1966171168
    %v1372 = vunpack.c.0.s8 %v1371
    %v1373 = vlaneseq
    %v1374 = vshrl.u32 %v1373, 7
    %v1375 = vsub.s32 %v1372, %v1374
    %v1376 = vrot.slane %v1360, %v1375
    %v1378 = vunpack.c.l.s4 1966171168
    %v1379 = vunpack.c.0.s8 %v1378
    %v1380 = vlaneseq
    %v1381 = vshrl.u32 %v1380, 7
    %v1382 = vsub.s32 %v1379, %v1381
    %v1383 = vrot.slane %v1361, %v1382
    %v1385 = vunpack.c.l.s4 1966171168
    %v1386 = vunpack.c.0.s8 %v1385
    %v1387 = vlaneseq
    %v1388 = vshrl.u32 %v1387, 7
    %v1389 = vsub.s32 %v1386, %v1388
    %v1390 = vrot.slane %v1362, %v1389
    %v1391 = vcombine.low %v1369, %v1376
    %v1392 = vcombine.low %v1383, %v1390
    %v1394 = vunpack.c.l.s4 1966171168
    %v1395 = vunpack.c.0.s8 %v1394
    %v1396 = vlaneseq
    %v1397 = vshrl.u32 %v1396, 7
    %v1398 = vsub.s32 %v1395, %v1397
    %v1399 = vrot.slane %v1391, %v1398
    %v1401 = vunpack.c.l.s4 1966171168
    %v1402 = vunpack.c.0.s8 %v1401
    %v1403 = vlaneseq
    %v1404 = vshrl.u32 %v1403, 7
    %v1405 = vsub.s32 %v1402, %v1404
    %v1406 = vrot.slane %v1392, %v1405
    %v1407 = vcombine.low %v1399, %v1406
    %v1408 = vcombine.low %v336, %v340
    %v1409 = vcombine.low %v344, %v348
    %v1410 = vcombine.low %v352, %v356
    %v1411 = vcombine.low %v360, %v364
    %v1413 = vunpack.c.l.s4 1966171168
    %v1414 = vunpack.c.0.s8 %v1413
    %v1415 = vlaneseq
    %v1416 = vshrl.u32 %v1415, 7
    %v1417 = vsub.s32 %v1414, %v1416
    %v1418 = vrot.slane %v1408, %v1417
    %v1420 = vunpack.c.l.s4 1966171168
    %v1421 = vunpack.c.0.s8 %v1420
    %v1422 = vlaneseq
    %v1423 = vshrl.u32 %v1422, 7
    %v1424 = vsub.s32 %v1421, %v1423
    %v1425 = vrot.slane %v1409, %v1424
    %v1427 = vunpack.c.l.s4 1966171168
    %v1428 = vunpack.c.0.s8 %v1427
    %v1429 = vlaneseq
    %v1430 = vshrl.u32 %v1429, 7
    %v1431 = vsub.s32 %v1428, %v1430
    %v1432 = vrot.slane %v1410, %v1431
    %v1434 = vunpack.c.l.s4 1966171168
    %v1435 = vunpack.c.0.s8 %v1434
    %v1436 = vlaneseq
    %v1437 = vshrl.u32 %v1436, 7
    %v1438 = vsub.s32 %v1435, %v1437
    %v1439 = vrot.slane %v1411, %v1438
    %v1440 = vcombine.low %v1418, %v1425
    %v1441 = vcombine.low %v1432, %v1439
    %v1443 = vunpack.c.l.s4 1966171168
    %v1444 = vunpack.c.0.s8 %v1443
    %v1445 = vlaneseq
    %v1446 = vshrl.u32 %v1445, 7
    %v1447 = vsub.s32 %v1444, %v1446
    %v1448 = vrot.slane %v1440, %v1447
    %v1450 = vunpack.c.l.s4 1966171168
    %v1451 = vunpack.c.0.s8 %v1450
    %v1452 = vlaneseq
    %v1453 = vshrl.u32 %v1452, 7
    %v1454 = vsub.s32 %v1451, %v1453
    %v1455 = vrot.slane %v1441, %v1454
    %v1456 = vcombine.low %v1448, %v1455
    %v1457 = vcombine.low %v368, %v372
    %v1458 = vcombine.low %v376, %v380
    %v1459 = vcombine.low %v384, %v388
    %v1460 = vcombine.low %v392, %v396
    %v1462 = vunpack.c.l.s4 1966171168
    %v1463 = vunpack.c.0.s8 %v1462
    %v1464 = vlaneseq
    %v1465 = vshrl.u32 %v1464, 7
    %v1466 = vsub.s32 %v1463, %v1465
    %v1467 = vrot.slane %v1457, %v1466
    %v1469 = vunpack.c.l.s4 1966171168
    %v1470 = vunpack.c.0.s8 %v1469
    %v1471 = vlaneseq
    %v1472 = vshrl.u32 %v1471, 7
    %v1473 = vsub.s32 %v1470, %v1472
    %v1474 = vrot.slane %v1458, %v1473
    %v1476 = vunpack.c.l.s4 1966171168
    %v1477 = vunpack.c.0.s8 %v1476
    %v1478 = vlaneseq
    %v1479 = vshrl.u32 %v1478, 7
    %v1480 = vsub.s32 %v1477, %v1479
    %v1481 = vrot.slane %v1459, %v1480
    %v1483 = vunpack.c.l.s4 1966171168
    %v1484 = vunpack.c.0.s8 %v1483
    %v1485 = vlaneseq
    %v1486 = vshrl.u32 %v1485, 7
    %v1487 = vsub.s32 %v1484, %v1486
    %v1488 = vrot.slane %v1460, %v1487
    %v1489 = vcombine.low %v1467, %v1474
    %v1490 = vcombine.low %v1481, %v1488
    %v1492 = vunpack.c.l.s4 1966171168
    %v1493 = vunpack.c.0.s8 %v1492
    %v1494 = vlaneseq
    %v1495 = vshrl.u32 %v1494, 7
    %v1496 = vsub.s32 %v1493, %v1495
    %v1497 = vrot.slane %v1489, %v1496
    %v1499 = vunpack.c.l.s4 1966171168
    %v1500 = vunpack.c.0.s8 %v1499
    %v1501 = vlaneseq
    %v1502 = vshrl.u32 %v1501, 7
    %v1503 = vsub.s32 %v1500, %v1502
    %v1504 = vrot.slane %v1490, %v1503
    %v1505 = vcombine.low %v1497, %v1504
    %v1506 = vcombine.low %v400, %v404
    %v1507 = vcombine.low %v408, %v412
    %v1508 = vcombine.low %v416, %v420
    %v1509 = vcombine.low %v424, %v428
    %v1511 = vunpack.c.l.s4 1966171168
    %v1512 = vunpack.c.0.s8 %v1511
    %v1513 = vlaneseq
    %v1514 = vshrl.u32 %v1513, 7
    %v1515 = vsub.s32 %v1512, %v1514
    %v1516 = vrot.slane %v1506, %v1515
    %v1518 = vunpack.c.l.s4 1966171168
    %v1519 = vunpack.c.0.s8 %v1518
    %v1520 = vlaneseq
    %v1521 = vshrl.u32 %v1520, 7
    %v1522 = vsub.s32 %v1519, %v1521
    %v1523 = vrot.slane %v1507, %v1522
    %v1525 = vunpack.c.l.s4 1966171168
    %v1526 = vunpack.c.0.s8 %v1525
    %v1527 = vlaneseq
    %v1528 = vshrl.u32 %v1527, 7
    %v1529 = vsub.s32 %v1526, %v1528
    %v1530 = vrot.slane %v1508, %v1529
    %v1532 = vunpack.c.l.s4 1966171168
    %v1533 = vunpack.c.0.s8 %v1532
    %v1534 = vlaneseq
    %v1535 = vshrl.u32 %v1534, 7
    %v1536 = vsub.s32 %v1533, %v1535
    %v1537 = vrot.slane %v1509, %v1536
    %v1538 = vcombine.low %v1516, %v1523
    %v1539 = vcombine.low %v1530, %v1537
    %v1541 = vunpack.c.l.s4 1966171168
    %v1542 = vunpack.c.0.s8 %v1541
    %v1543 = vlaneseq
    %v1544 = vshrl.u32 %v1543, 7
    %v1545 = vsub.s32 %v1542, %v1544
    %v1546 = vrot.slane %v1538, %v1545
    %v1548 = vunpack.c.l.s4 1966171168
    %v1549 = vunpack.c.0.s8 %v1548
    %v1550 = vlaneseq
    %v1551 = vshrl.u32 %v1550, 7
    %v1552 = vsub.s32 %v1549, %v1551
    %v1553 = vrot.slane %v1539, %v1552
    %v1554 = vcombine.low %v1546, %v1553
    %v1555 = vcombine.low %v432, %v436
    %v1556 = vcombine.low %v440, %v444
    %v1557 = vcombine.low %v448, %v452
    %v1558 = vcombine.low %v456, %v460
    %v1560 = vunpack.c.l.s4 1966171168
    %v1561 = vunpack.c.0.s8 %v1560
    %v1562 = vlaneseq
    %v1563 = vshrl.u32 %v1562, 7
    %v1564 = vsub.s32 %v1561, %v1563
    %v1565 = vrot.slane %v1555, %v1564
    %v1567 = vunpack.c.l.s4 1966171168
    %v1568 = vunpack.c.0.s8 %v1567
    %v1569 = vlaneseq
    %v1570 = vshrl.u32 %v1569, 7
    %v1571 = vsub.s32 %v1568, %v1570
    %v1572 = vrot.slane %v1556, %v1571
    %v1574 = vunpack.c.l.s4 1966171168
    %v1575 = vunpack.c.0.s8 %v1574
    %v1576 = vlaneseq
    %v1577 = vshrl.u32 %v1576, 7
    %v1578 = vsub.s32 %v1575, %v1577
    %v1579 = vrot.slane %v1557, %v1578
    %v1581 = vunpack.c.l.s4 1966171168
    %v1582 = vunpack.c.0.s8 %v1581
    %v1583 = vlaneseq
    %v1584 = vshrl.u32 %v1583, 7
    %v1585 = vsub.s32 %v1582, %v1584
    %v1586 = vrot.slane %v1558, %v1585
    %v1587 = vcombine.low %v1565, %v1572
    %v1588 = vcombine.low %v1579, %v1586
    %v1590 = vunpack.c.l.s4 1966171168
    %v1591 = vunpack.c.0.s8 %v1590
    %v1592 = vlaneseq
    %v1593 = vshrl.u32 %v1592, 7
    %v1594 = vsub.s32 %v1591, %v1593
    %v1595 = vrot.slane %v1587, %v1594
    %v1597 = vunpack.c.l.s4 1966171168
    %v1598 = vunpack.c.0.s8 %v1597
    %v1599 = vlaneseq
    %v1600 = vshrl.u32 %v1599, 7
    %v1601 = vsub.s32 %v1598, %v1600
    %v1602 = vrot.slane %v1588, %v1601
    %v1603 = vcombine.low %v1595, %v1602
    %v1604 = vcombine.low %v464, %v468
    %v1605 = vcombine.low %v472, %v476
    %v1606 = vcombine.low %v480, %v484
    %v1607 = vcombine.low %v488, %v492
    %v1609 = vunpack.c.l.s4 1966171168
    %v1610 = vunpack.c.0.s8 %v1609
    %v1611 = vlaneseq
    %v1612 = vshrl.u32 %v1611, 7
    %v1613 = vsub.s32 %v1610, %v1612
    %v1614 = vrot.slane %v1604, %v1613
    %v1616 = vunpack.c.l.s4 1966171168
    %v1617 = vunpack.c.0.s8 %v1616
    %v1618 = vlaneseq
    %v1619 = vshrl.u32 %v1618, 7
    %v1620 = vsub.s32 %v1617, %v1619
    %v1621 = vrot.slane %v1605, %v1620
    %v1623 = vunpack.c.l.s4 1966171168
    %v1624 = vunpack.c.0.s8 %v1623
    %v1625 = vlaneseq
    %v1626 = vshrl.u32 %v1625, 7
    %v1627 = vsub.s32 %v1624, %v1626
    %v1628 = vrot.slane %v1606, %v1627
    %v1630 = vunpack.c.l.s4 1966171168
    %v1631 = vunpack.c.0.s8 %v1630
    %v1632 = vlaneseq
    %v1633 = vshrl.u32 %v1632, 7
    %v1634 = vsub.s32 %v1631, %v1633
    %v1635 = vrot.slane %v1607, %v1634
    %v1636 = vcombine.low %v1614, %v1621
    %v1637 = vcombine.low %v1628, %v1635
    %v1639 = vunpack.c.l.s4 1966171168
    %v1640 = vunpack.c.0.s8 %v1639
    %v1641 = vlaneseq
    %v1642 = vshrl.u32 %v1641, 7
    %v1643 = vsub.s32 %v1640, %v1642
    %v1644 = vrot.slane %v1636, %v1643
    %v1646 = vunpack.c.l.s4 1966171168
    %v1647 = vunpack.c.0.s8 %v1646
    %v1648 = vlaneseq
    %v1649 = vshrl.u32 %v1648, 7
    %v1650 = vsub.s32 %v1647, %v1649
    %v1651 = vrot.slane %v1637, %v1650
    %v1652 = vcombine.low %v1644, %v1651
    %v1653 = vcombine.low %v496, %v500
    %v1654 = vcombine.low %v504, %v508
    %v1655 = vcombine.low %v512, %v516
    %v1656 = vcombine.low %v520, %v524
    %v1658 = vunpack.c.l.s4 1966171168
    %v1659 = vunpack.c.0.s8 %v1658
    %v1660 = vlaneseq
    %v1661 = vshrl.u32 %v1660, 7
    %v1662 = vsub.s32 %v1659, %v1661
    %v1663 = vrot.slane %v1653, %v1662
    %v1665 = vunpack.c.l.s4 1966171168
    %v1666 = vunpack.c.0.s8 %v1665
    %v1667 = vlaneseq
    %v1668 = vshrl.u32 %v1667, 7
    %v1669 = vsub.s32 %v1666, %v1668
    %v1670 = vrot.slane %v1654, %v1669
    %v1672 = vunpack.c.l.s4 1966171168
    %v1673 = vunpack.c.0.s8 %v1672
    %v1674 = vlaneseq
    %v1675 = vshrl.u32 %v1674, 7
    %v1676 = vsub.s32 %v1673, %v1675
    %v1677 = vrot.slane %v1655, %v1676
    %v1679 = vunpack.c.l.s4 1966171168
    %v1680 = vunpack.c.0.s8 %v1679
    %v1681 = vlaneseq
    %v1682 = vshrl.u32 %v1681, 7
    %v1683 = vsub.s32 %v1680, %v1682
    %v1684 = vrot.slane %v1656, %v1683
    %v1685 = vcombine.low %v1663, %v1670
    %v1686 = vcombine.low %v1677, %v1684
    %v1688 = vunpack.c.l.s4 1966171168
    %v1689 = vunpack.c.0.s8 %v1688
    %v1690 = vlaneseq
    %v1691 = vshrl.u32 %v1690, 7
    %v1692 = vsub.s32 %v1689, %v1691
    %v1693 = vrot.slane %v1685, %v1692
    %v1695 = vunpack.c.l.s4 1966171168
    %v1696 = vunpack.c.0.s8 %v1695
    %v1697 = vlaneseq
    %v1698 = vshrl.u32 %v1697, 7
    %v1699 = vsub.s32 %v1696, %v1698
    %v1700 = vrot.slane %v1686, %v1699
    %v1701 = vcombine.low %v1693, %v1700
    %v1702 = vcombine.low %v528, %v532
    %v1703 = vcombine.low %v536, %v540
    %v1704 = vcombine.low %v544, %v548
    %v1705 = vcombine.low %v552, %v556
    %v1707 = vunpack.c.l.s4 1966171168
    %v1708 = vunpack.c.0.s8 %v1707
    %v1709 = vlaneseq
    %v1710 = vshrl.u32 %v1709, 7
    %v1711 = vsub.s32 %v1708, %v1710
    %v1712 = vrot.slane %v1702, %v1711
    %v1714 = vunpack.c.l.s4 1966171168
    %v1715 = vunpack.c.0.s8 %v1714
    %v1716 = vlaneseq
    %v1717 = vshrl.u32 %v1716, 7
    %v1718 = vsub.s32 %v1715, %v1717
    %v1719 = vrot.slane %v1703, %v1718
    %v1721 = vunpack.c.l.s4 1966171168
    %v1722 = vunpack.c.0.s8 %v1721
    %v1723 = vlaneseq
    %v1724 = vshrl.u32 %v1723, 7
    %v1725 = vsub.s32 %v1722, %v1724
    %v1726 = vrot.slane %v1704, %v1725
    %v1728 = vunpack.c.l.s4 1966171168
    %v1729 = vunpack.c.0.s8 %v1728
    %v1730 = vlaneseq
    %v1731 = vshrl.u32 %v1730, 7
    %v1732 = vsub.s32 %v1729, %v1731
    %v1733 = vrot.slane %v1705, %v1732
    %v1734 = vcombine.low %v1712, %v1719
    %v1735 = vcombine.low %v1726, %v1733
    %v1737 = vunpack.c.l.s4 1966171168
    %v1738 = vunpack.c.0.s8 %v1737
    %v1739 = vlaneseq
    %v1740 = vshrl.u32 %v1739, 7
    %v1741 = vsub.s32 %v1738, %v1740
    %v1742 = vrot.slane %v1734, %v1741
    %v1744 = vunpack.c.l.s4 1966171168
    %v1745 = vunpack.c.0.s8 %v1744
    %v1746 = vlaneseq
    %v1747 = vshrl.u32 %v1746, 7
    %v1748 = vsub.s32 %v1745, %v1747
    %v1749 = vrot.slane %v1735, %v1748
    %v1750 = vcombine.low %v1742, %v1749
    %v1751 = vcombine.low %v560, %v564
    %v1752 = vcombine.low %v568, %v572
    %v1753 = vcombine.low %v576, %v580
    %v1754 = vcombine.low %v584, %v588
    %v1756 = vunpack.c.l.s4 1966171168
    %v1757 = vunpack.c.0.s8 %v1756
    %v1758 = vlaneseq
    %v1759 = vshrl.u32 %v1758, 7
    %v1760 = vsub.s32 %v1757, %v1759
    %v1761 = vrot.slane %v1751, %v1760
    %v1763 = vunpack.c.l.s4 1966171168
    %v1764 = vunpack.c.0.s8 %v1763
    %v1765 = vlaneseq
    %v1766 = vshrl.u32 %v1765, 7
    %v1767 = vsub.s32 %v1764, %v1766
    %v1768 = vrot.slane %v1752, %v1767
    %v1770 = vunpack.c.l.s4 1966171168
    %v1771 = vunpack.c.0.s8 %v1770
    %v1772 = vlaneseq
    %v1773 = vshrl.u32 %v1772, 7
    %v1774 = vsub.s32 %v1771, %v1773
    %v1775 = vrot.slane %v1753, %v1774
    %v1777 = vunpack.c.l.s4 1966171168
    %v1778 = vunpack.c.0.s8 %v1777
    %v1779 = vlaneseq
    %v1780 = vshrl.u32 %v1779, 7
    %v1781 = vsub.s32 %v1778, %v1780
    %v1782 = vrot.slane %v1754, %v1781
    %v1783 = vcombine.low %v1761, %v1768
    %v1784 = vcombine.low %v1775, %v1782
    %v1786 = vunpack.c.l.s4 1966171168
    %v1787 = vunpack.c.0.s8 %v1786
    %v1788 = vlaneseq
    %v1789 = vshrl.u32 %v1788, 7
    %v1790 = vsub.s32 %v1787, %v1789
    %v1791 = vrot.slane %v1783, %v1790
    %v1793 = vunpack.c.l.s4 1966171168
    %v1794 = vunpack.c.0.s8 %v1793
    %v1795 = vlaneseq
    %v1796 = vshrl.u32 %v1795, 7
    %v1797 = vsub.s32 %v1794, %v1796
    %v1798 = vrot.slane %v1784, %v1797
    %v1799 = vcombine.low %v1791, %v1798
    %v1800 = vcombine.low %v592, %v596
    %v1801 = vcombine.low %v600, %v604
    %v1802 = vcombine.low %v608, %v612
    %v1803 = vcombine.low %v616, %v620
    %v1805 = vunpack.c.l.s4 1966171168
    %v1806 = vunpack.c.0.s8 %v1805
    %v1807 = vlaneseq
    %v1808 = vshrl.u32 %v1807, 7
    %v1809 = vsub.s32 %v1806, %v1808
    %v1810 = vrot.slane %v1800, %v1809
    %v1812 = vunpack.c.l.s4 1966171168
    %v1813 = vunpack.c.0.s8 %v1812
    %v1814 = vlaneseq
    %v1815 = vshrl.u32 %v1814, 7
    %v1816 = vsub.s32 %v1813, %v1815
    %v1817 = vrot.slane %v1801, %v1816
    %v1819 = vunpack.c.l.s4 1966171168
    %v1820 = vunpack.c.0.s8 %v1819
    %v1821 = vlaneseq
    %v1822 = vshrl.u32 %v1821, 7
    %v1823 = vsub.s32 %v1820, %v1822
    %v1824 = vrot.slane %v1802, %v1823
    %v1826 = vunpack.c.l.s4 1966171168
    %v1827 = vunpack.c.0.s8 %v1826
    %v1828 = vlaneseq
    %v1829 = vshrl.u32 %v1828, 7
    %v1830 = vsub.s32 %v1827, %v1829
    %v1831 = vrot.slane %v1803, %v1830
    %v1832 = vcombine.low %v1810, %v1817
    %v1833 = vcombine.low %v1824, %v1831
    %v1835 = vunpack.c.l.s4 1966171168
    %v1836 = vunpack.c.0.s8 %v1835
    %v1837 = vlaneseq
    %v1838 = vshrl.u32 %v1837, 7
    %v1839 = vsub.s32 %v1836, %v1838
    %v1840 = vrot.slane %v1832, %v1839
    %v1842 = vunpack.c.l.s4 1966171168
    %v1843 = vunpack.c.0.s8 %v1842
    %v1844 = vlaneseq
    %v1845 = vshrl.u32 %v1844, 7
    %v1846 = vsub.s32 %v1843, %v1845
    %v1847 = vrot.slane %v1833, %v1846
    %v1848 = vcombine.low %v1840, %v1847
    %v1849 = vcombine.low %v624, %v628
    %v1850 = vcombine.low %v632, %v636
    %v1851 = vcombine.low %v640, %v644
    %v1852 = vcombine.low %v648, %v652
    %v1854 = vunpack.c.l.s4 1966171168
    %v1855 = vunpack.c.0.s8 %v1854
    %v1856 = vlaneseq
    %v1857 = vshrl.u32 %v1856, 7
    %v1858 = vsub.s32 %v1855, %v1857
    %v1859 = vrot.slane %v1849, %v1858
    %v1861 = vunpack.c.l.s4 1966171168
    %v1862 = vunpack.c.0.s8 %v1861
    %v1863 = vlaneseq
    %v1864 = vshrl.u32 %v1863, 7
    %v1865 = vsub.s32 %v1862, %v1864
    %v1866 = vrot.slane %v1850, %v1865
    %v1868 = vunpack.c.l.s4 1966171168
    %v1869 = vunpack.c.0.s8 %v1868
    %v1870 = vlaneseq
    %v1871 = vshrl.u32 %v1870, 7
    %v1872 = vsub.s32 %v1869, %v1871
    %v1873 = vrot.slane %v1851, %v1872
    %v1875 = vunpack.c.l.s4 1966171168
    %v1876 = vunpack.c.0.s8 %v1875
    %v1877 = vlaneseq
    %v1878 = vshrl.u32 %v1877, 7
    %v1879 = vsub.s32 %v1876, %v1878
    %v1880 = vrot.slane %v1852, %v1879
    %v1881 = vcombine.low %v1859, %v1866
    %v1882 = vcombine.low %v1873, %v1880
    %v1884 = vunpack.c.l.s4 1966171168
    %v1885 = vunpack.c.0.s8 %v1884
    %v1886 = vlaneseq
    %v1887 = vshrl.u32 %v1886, 7
    %v1888 = vsub.s32 %v1885, %v1887
    %v1889 = vrot.slane %v1881, %v1888
    %v1891 = vunpack.c.l.s4 1966171168
    %v1892 = vunpack.c.0.s8 %v1891
    %v1893 = vlaneseq
    %v1894 = vshrl.u32 %v1893, 7
    %v1895 = vsub.s32 %v1892, %v1894
    %v1896 = vrot.slane %v1882, %v1895
    %v1897 = vcombine.low %v1889, %v1896
    %v1898 = vcombine.low %v656, %v660
    %v1899 = vcombine.low %v664, %v668
    %v1900 = vcombine.low %v672, %v676
    %v1901 = vcombine.low %v680, %v684
    %v1903 = vunpack.c.l.s4 1966171168
    %v1904 = vunpack.c.0.s8 %v1903
    %v1905 = vlaneseq
    %v1906 = vshrl.u32 %v1905, 7
    %v1907 = vsub.s32 %v1904, %v1906
    %v1908 = vrot.slane %v1898, %v1907
    %v1910 = vunpack.c.l.s4 1966171168
    %v1911 = vunpack.c.0.s8 %v1910
    %v1912 = vlaneseq
    %v1913 = vshrl.u32 %v1912, 7
    %v1914 = vsub.s32 %v1911, %v1913
    %v1915 = vrot.slane %v1899, %v1914
    %v1917 = vunpack.c.l.s4 1966171168
    %v1918 = vunpack.c.0.s8 %v1917
    %v1919 = vlaneseq
    %v1920 = vshrl.u32 %v1919, 7
    %v1921 = vsub.s32 %v1918, %v1920
    %v1922 = vrot.slane %v1900, %v1921
    %v1924 = vunpack.c.l.s4 1966171168
    %v1925 = vunpack.c.0.s8 %v1924
    %v1926 = vlaneseq
    %v1927 = vshrl.u32 %v1926, 7
    %v1928 = vsub.s32 %v1925, %v1927
    %v1929 = vrot.slane %v1901, %v1928
    %v1930 = vcombine.low %v1908, %v1915
    %v1931 = vcombine.low %v1922, %v1929
    %v1933 = vunpack.c.l.s4 1966171168
    %v1934 = vunpack.c.0.s8 %v1933
    %v1935 = vlaneseq
    %v1936 = vshrl.u32 %v1935, 7
    %v1937 = vsub.s32 %v1934, %v1936
    %v1938 = vrot.slane %v1930, %v1937
    %v1940 = vunpack.c.l.s4 1966171168
    %v1941 = vunpack.c.0.s8 %v1940
    %v1942 = vlaneseq
    %v1943 = vshrl.u32 %v1942, 7
    %v1944 = vsub.s32 %v1941, %v1943
    %v1945 = vrot.slane %v1931, %v1944
    %v1946 = vcombine.low %v1938, %v1945
    %v1947 = vcombine.low %v688, %v692
    %v1948 = vcombine.low %v696, %v700
    %v1949 = vcombine.low %v704, %v708
    %v1950 = vcombine.low %v712, %v716
    %v1952 = vunpack.c.l.s4 1966171168
    %v1953 = vunpack.c.0.s8 %v1952
    %v1954 = vlaneseq
    %v1955 = vshrl.u32 %v1954, 7
    %v1956 = vsub.s32 %v1953, %v1955
    %v1957 = vrot.slane %v1947, %v1956
    %v1959 = vunpack.c.l.s4 1966171168
    %v1960 = vunpack.c.0.s8 %v1959
    %v1961 = vlaneseq
    %v1962 = vshrl.u32 %v1961, 7
    %v1963 = vsub.s32 %v1960, %v1962
    %v1964 = vrot.slane %v1948, %v1963
    %v1966 = vunpack.c.l.s4 1966171168
    %v1967 = vunpack.c.0.s8 %v1966
    %v1968 = vlaneseq
    %v1969 = vshrl.u32 %v1968, 7
    %v1970 = vsub.s32 %v1967, %v1969
    %v1971 = vrot.slane %v1949, %v1970
    %v1973 = vunpack.c.l.s4 1966171168
    %v1974 = vunpack.c.0.s8 %v1973
    %v1975 = vlaneseq
    %v1976 = vshrl.u32 %v1975, 7
    %v1977 = vsub.s32 %v1974, %v1976
    %v1978 = vrot.slane %v1950, %v1977
    %v1979 = vcombine.low %v1957, %v1964
    %v1980 = vcombine.low %v1971, %v1978
    %v1982 = vunpack.c.l.s4 1966171168
    %v1983 = vunpack.c.0.s8 %v1982
    %v1984 = vlaneseq
    %v1985 = vshrl.u32 %v1984, 7
    %v1986 = vsub.s32 %v1983, %v1985
    %v1987 = vrot.slane %v1979, %v1986
    %v1989 = vunpack.c.l.s4 1966171168
    %v1990 = vunpack.c.0.s8 %v1989
    %v1991 = vlaneseq
    %v1992 = vshrl.u32 %v1991, 7
    %v1993 = vsub.s32 %v1990, %v1992
    %v1994 = vrot.slane %v1980, %v1993
    %v1995 = vcombine.low %v1987, %v1994
    %v1996 = vcombine.low %v720, %v724
    %v1997 = vcombine.low %v728, %v732
    %v1998 = vcombine.low %v736, %v740
    %v1999 = vcombine.low %v744, %v748
    %v2001 = vunpack.c.l.s4 1966171168
    %v2002 = vunpack.c.0.s8 %v2001
    %v2003 = vlaneseq
    %v2004 = vshrl.u32 %v2003, 7
    %v2005 = vsub.s32 %v2002, %v2004
    %v2006 = vrot.slane %v1996, %v2005
    %v2008 = vunpack.c.l.s4 1966171168
    %v2009 = vunpack.c.0.s8 %v2008
    %v2010 = vlaneseq
    %v2011 = vshrl.u32 %v2010, 7
    %v2012 = vsub.s32 %v2009, %v2011
    %v2013 = vrot.slane %v1997, %v2012
    %v2015 = vunpack.c.l.s4 1966171168
    %v2016 = vunpack.c.0.s8 %v2015
    %v2017 = vlaneseq
    %v2018 = vshrl.u32 %v2017, 7
    %v2019 = vsub.s32 %v2016, %v2018
    %v2020 = vrot.slane %v1998, %v2019
    %v2022 = vunpack.c.l.s4 1966171168
    %v2023 = vunpack.c.0.s8 %v2022
    %v2024 = vlaneseq
    %v2025 = vshrl.u32 %v2024, 7
    %v2026 = vsub.s32 %v2023, %v2025
    %v2027 = vrot.slane %v1999, %v2026
    %v2028 = vcombine.low %v2006, %v2013
    %v2029 = vcombine.low %v2020, %v2027
    %v2031 = vunpack.c.l.s4 1966171168
    %v2032 = vunpack.c.0.s8 %v2031
    %v2033 = vlaneseq
    %v2034 = vshrl.u32 %v2033, 7
    %v2035 = vsub.s32 %v2032, %v2034
    %v2036 = vrot.slane %v2028, %v2035
    %v2038 = vunpack.c.l.s4 1966171168
    %v2039 = vunpack.c.0.s8 %v2038
    %v2040 = vlaneseq
    %v2041 = vshrl.u32 %v2040, 7
    %v2042 = vsub.s32 %v2039, %v2041
    %v2043 = vrot.slane %v2029, %v2042
    %v2044 = vcombine.low %v2036, %v2043
    %v2045 = vcombine.low %v752, %v756
    %v2046 = vcombine.low %v760, %v764
    %v2047 = vcombine.low %v768, %v772
    %v2048 = vcombine.low %v776, %v780
    %v2050 = vunpack.c.l.s4 1966171168
    %v2051 = vunpack.c.0.s8 %v2050
    %v2052 = vlaneseq
    %v2053 = vshrl.u32 %v2052, 7
    %v2054 = vsub.s32 %v2051, %v2053
    %v2055 = vrot.slane %v2045, %v2054
    %v2057 = vunpack.c.l.s4 1966171168
    %v2058 = vunpack.c.0.s8 %v2057
    %v2059 = vlaneseq
    %v2060 = vshrl.u32 %v2059, 7
    %v2061 = vsub.s32 %v2058, %v2060
    %v2062 = vrot.slane %v2046, %v2061
    %v2064 = vunpack.c.l.s4 1966171168
    %v2065 = vunpack.c.0.s8 %v2064
    %v2066 = vlaneseq
    %v2067 = vshrl.u32 %v2066, 7
    %v2068 = vsub.s32 %v2065, %v2067
    %v2069 = vrot.slane %v2047, %v2068
    %v2071 = vunpack.c.l.s4 1966171168
    %v2072 = vunpack.c.0.s8 %v2071
    %v2073 = vlaneseq
    %v2074 = vshrl.u32 %v2073, 7
    %v2075 = vsub.s32 %v2072, %v2074
    %v2076 = vrot.slane %v2048, %v2075
    %v2077 = vcombine.low %v2055, %v2062
    %v2078 = vcombine.low %v2069, %v2076
    %v2080 = vunpack.c.l.s4 1966171168
    %v2081 = vunpack.c.0.s8 %v2080
    %v2082 = vlaneseq
    %v2083 = vshrl.u32 %v2082, 7
    %v2084 = vsub.s32 %v2081, %v2083
    %v2085 = vrot.slane %v2077, %v2084
    %v2087 = vunpack.c.l.s4 1966171168
    %v2088 = vunpack.c.0.s8 %v2087
    %v2089 = vlaneseq
    %v2090 = vshrl.u32 %v2089, 7
    %v2091 = vsub.s32 %v2088, %v2090
    %v2092 = vrot.slane %v2078, %v2091
    %v2093 = vcombine.low %v2085, %v2092
    %v2094 = vcombine.low %v784, %v788
    %v2095 = vcombine.low %v792, %v796
    %v2096 = vcombine.low %v800, %v804
    %v2097 = vcombine.low %v808, %v812
    %v2099 = vunpack.c.l.s4 1966171168
    %v2100 = vunpack.c.0.s8 %v2099
    %v2101 = vlaneseq
    %v2102 = vshrl.u32 %v2101, 7
    %v2103 = vsub.s32 %v2100, %v2102
    %v2104 = vrot.slane %v2094, %v2103
    %v2106 = vunpack.c.l.s4 1966171168
    %v2107 = vunpack.c.0.s8 %v2106
    %v2108 = vlaneseq
    %v2109 = vshrl.u32 %v2108, 7
    %v2110 = vsub.s32 %v2107, %v2109
    %v2111 = vrot.slane %v2095, %v2110
    %v2113 = vunpack.c.l.s4 1966171168
    %v2114 = vunpack.c.0.s8 %v2113
    %v2115 = vlaneseq
    %v2116 = vshrl.u32 %v2115, 7
    %v2117 = vsub.s32 %v2114, %v2116
    %v2118 = vrot.slane %v2096, %v2117
    %v2120 = vunpack.c.l.s4 1966171168
    %v2121 = vunpack.c.0.s8 %v2120
    %v2122 = vlaneseq
    %v2123 = vshrl.u32 %v2122, 7
    %v2124 = vsub.s32 %v2121, %v2123
    %v2125 = vrot.slane %v2097, %v2124
    %v2126 = vcombine.low %v2104, %v2111
    %v2127 = vcombine.low %v2118, %v2125
    %v2129 = vunpack.c.l.s4 1966171168
    %v2130 = vunpack.c.0.s8 %v2129
    %v2131 = vlaneseq
    %v2132 = vshrl.u32 %v2131, 7
    %v2133 = vsub.s32 %v2130, %v2132
    %v2134 = vrot.slane %v2126, %v2133
    %v2136 = vunpack.c.l.s4 1966171168
    %v2137 = vunpack.c.0.s8 %v2136
    %v2138 = vlaneseq
    %v2139 = vshrl.u32 %v2138, 7
    %v2140 = vsub.s32 %v2137, %v2139
    %v2141 = vrot.slane %v2127, %v2140
    %v2142 = vcombine.low %v2134, %v2141
    %v2143 = vcombine.low %v816, %v820
    %v2144 = vcombine.low %v824, %v828
    %v2145 = vcombine.low %v832, %v836
    %v2146 = vcombine.low %v840, %v844
    %v2148 = vunpack.c.l.s4 1966171168
    %v2149 = vunpack.c.0.s8 %v2148
    %v2150 = vlaneseq
    %v2151 = vshrl.u32 %v2150, 7
    %v2152 = vsub.s32 %v2149, %v2151
    %v2153 = vrot.slane %v2143, %v2152
    %v2155 = vunpack.c.l.s4 1966171168
    %v2156 = vunpack.c.0.s8 %v2155
    %v2157 = vlaneseq
    %v2158 = vshrl.u32 %v2157, 7
    %v2159 = vsub.s32 %v2156, %v2158
    %v2160 = vrot.slane %v2144, %v2159
    %v2162 = vunpack.c.l.s4 1966171168
    %v2163 = vunpack.c.0.s8 %v2162
    %v2164 = vlaneseq
    %v2165 = vshrl.u32 %v2164, 7
    %v2166 = vsub.s32 %v2163, %v2165
    %v2167 = vrot.slane %v2145, %v2166
    %v2169 = vunpack.c.l.s4 1966171168
    %v2170 = vunpack.c.0.s8 %v2169
    %v2171 = vlaneseq
    %v2172 = vshrl.u32 %v2171, 7
    %v2173 = vsub.s32 %v2170, %v2172
    %v2174 = vrot.slane %v2146, %v2173
    %v2175 = vcombine.low %v2153, %v2160
    %v2176 = vcombine.low %v2167, %v2174
    %v2178 = vunpack.c.l.s4 1966171168
    %v2179 = vunpack.c.0.s8 %v2178
    %v2180 = vlaneseq
    %v2181 = vshrl.u32 %v2180, 7
    %v2182 = vsub.s32 %v2179, %v2181
    %v2183 = vrot.slane %v2175, %v2182
    %v2185 = vunpack.c.l.s4 1966171168
    %v2186 = vunpack.c.0.s8 %v2185
    %v2187 = vlaneseq
    %v2188 = vshrl.u32 %v2187, 7
    %v2189 = vsub.s32 %v2186, %v2188
    %v2190 = vrot.slane %v2176, %v2189
    %v2191 = vcombine.low %v2183, %v2190
    %v2192 = vcombine.low %v848, %v852
    %v2193 = vcombine.low %v856, %v860
    %v2194 = vcombine.low %v864, %v868
    %v2195 = vcombine.low %v872, %v876
    %v2197 = vunpack.c.l.s4 1966171168
    %v2198 = vunpack.c.0.s8 %v2197
    %v2199 = vlaneseq
    %v2200 = vshrl.u32 %v2199, 7
    %v2201 = vsub.s32 %v2198, %v2200
    %v2202 = vrot.slane %v2192, %v2201
    %v2204 = vunpack.c.l.s4 1966171168
    %v2205 = vunpack.c.0.s8 %v2204
    %v2206 = vlaneseq
    %v2207 = vshrl.u32 %v2206, 7
    %v2208 = vsub.s32 %v2205, %v2207
    %v2209 = vrot.slane %v2193, %v2208
    %v2211 = vunpack.c.l.s4 1966171168
    %v2212 = vunpack.c.0.s8 %v2211
    %v2213 = vlaneseq
    %v2214 = vshrl.u32 %v2213, 7
    %v2215 = vsub.s32 %v2212, %v2214
    %v2216 = vrot.slane %v2194, %v2215
    %v2218 = vunpack.c.l.s4 1966171168
    %v2219 = vunpack.c.0.s8 %v2218
    %v2220 = vlaneseq
    %v2221 = vshrl.u32 %v2220, 7
    %v2222 = vsub.s32 %v2219, %v2221
    %v2223 = vrot.slane %v2195, %v2222
    %v2224 = vcombine.low %v2202, %v2209
    %v2225 = vcombine.low %v2216, %v2223
    %v2227 = vunpack.c.l.s4 1966171168
    %v2228 = vunpack.c.0.s8 %v2227
    %v2229 = vlaneseq
    %v2230 = vshrl.u32 %v2229, 7
    %v2231 = vsub.s32 %v2228, %v2230
    %v2232 = vrot.slane %v2224, %v2231
    %v2234 = vunpack.c.l.s4 1966171168
    %v2235 = vunpack.c.0.s8 %v2234
    %v2236 = vlaneseq
    %v2237 = vshrl.u32 %v2236, 7
    %v2238 = vsub.s32 %v2235, %v2237
    %v2239 = vrot.slane %v2225, %v2238
    %v2240 = vcombine.low %v2232, %v2239
    %v2241 = vcombine.low %v880, %v884
    %v2242 = vcombine.low %v888, %v892
    %v2243 = vcombine.low %v896, %v900
    %v2244 = vcombine.low %v904, %v908
    %v2246 = vunpack.c.l.s4 1966171168
    %v2247 = vunpack.c.0.s8 %v2246
    %v2248 = vlaneseq
    %v2249 = vshrl.u32 %v2248, 7
    %v2250 = vsub.s32 %v2247, %v2249
    %v2251 = vrot.slane %v2241, %v2250
    %v2253 = vunpack.c.l.s4 1966171168
    %v2254 = vunpack.c.0.s8 %v2253
    %v2255 = vlaneseq
    %v2256 = vshrl.u32 %v2255, 7
    %v2257 = vsub.s32 %v2254, %v2256
    %v2258 = vrot.slane %v2242, %v2257
    %v2260 = vunpack.c.l.s4 1966171168
    %v2261 = vunpack.c.0.s8 %v2260
    %v2262 = vlaneseq
    %v2263 = vshrl.u32 %v2262, 7
    %v2264 = vsub.s32 %v2261, %v2263
    %v2265 = vrot.slane %v2243, %v2264
    %v2267 = vunpack.c.l.s4 1966171168
    %v2268 = vunpack.c.0.s8 %v2267
    %v2269 = vlaneseq
    %v2270 = vshrl.u32 %v2269, 7
    %v2271 = vsub.s32 %v2268, %v2270
    %v2272 = vrot.slane %v2244, %v2271
    %v2273 = vcombine.low %v2251, %v2258
    %v2274 = vcombine.low %v2265, %v2272
    %v2276 = vunpack.c.l.s4 1966171168
    %v2277 = vunpack.c.0.s8 %v2276
    %v2278 = vlaneseq
    %v2279 = vshrl.u32 %v2278, 7
    %v2280 = vsub.s32 %v2277, %v2279
    %v2281 = vrot.slane %v2273, %v2280
    %v2283 = vunpack.c.l.s4 1966171168
    %v2284 = vunpack.c.0.s8 %v2283
    %v2285 = vlaneseq
    %v2286 = vshrl.u32 %v2285, 7
    %v2287 = vsub.s32 %v2284, %v2286
    %v2288 = vrot.slane %v2274, %v2287
    %v2289 = vcombine.low %v2281, %v2288
    %v2290 = vcombine.low %v912, %v916
    %v2291 = vcombine.low %v920, %v924
    %v2292 = vcombine.low %v928, %v932
    %v2293 = vcombine.low %v936, %v940
    %v2295 = vunpack.c.l.s4 1966171168
    %v2296 = vunpack.c.0.s8 %v2295
    %v2297 = vlaneseq
    %v2298 = vshrl.u32 %v2297, 7
    %v2299 = vsub.s32 %v2296, %v2298
    %v2300 = vrot.slane %v2290, %v2299
    %v2302 = vunpack.c.l.s4 1966171168
    %v2303 = vunpack.c.0.s8 %v2302
    %v2304 = vlaneseq
    %v2305 = vshrl.u32 %v2304, 7
    %v2306 = vsub.s32 %v2303, %v2305
    %v2307 = vrot.slane %v2291, %v2306
    %v2309 = vunpack.c.l.s4 1966171168
    %v2310 = vunpack.c.0.s8 %v2309
    %v2311 = vlaneseq
    %v2312 = vshrl.u32 %v2311, 7
    %v2313 = vsub.s32 %v2310, %v2312
    %v2314 = vrot.slane %v2292, %v2313
    %v2316 = vunpack.c.l.s4 1966171168
    %v2317 = vunpack.c.0.s8 %v2316
    %v2318 = vlaneseq
    %v2319 = vshrl.u32 %v2318, 7
    %v2320 = vsub.s32 %v2317, %v2319
    %v2321 = vrot.slane %v2293, %v2320
    %v2322 = vcombine.low %v2300, %v2307
    %v2323 = vcombine.low %v2314, %v2321
    %v2325 = vunpack.c.l.s4 1966171168
    %v2326 = vunpack.c.0.s8 %v2325
    %v2327 = vlaneseq
    %v2328 = vshrl.u32 %v2327, 7
    %v2329 = vsub.s32 %v2326, %v2328
    %v2330 = vrot.slane %v2322, %v2329
    %v2332 = vunpack.c.l.s4 1966171168
    %v2333 = vunpack.c.0.s8 %v2332
    %v2334 = vlaneseq
    %v2335 = vshrl.u32 %v2334, 7
    %v2336 = vsub.s32 %v2333, %v2335
    %v2337 = vrot.slane %v2323, %v2336
    %v2338 = vcombine.low %v2330, %v2337
    %v2339 = vcombine.low %v944, %v948
    %v2340 = vcombine.low %v952, %v956
    %v2341 = vcombine.low %v960, %v964
    %v2342 = vcombine.low %v968, %v972
    %v2344 = vunpack.c.l.s4 1966171168
    %v2345 = vunpack.c.0.s8 %v2344
    %v2346 = vlaneseq
    %v2347 = vshrl.u32 %v2346, 7
    %v2348 = vsub.s32 %v2345, %v2347
    %v2349 = vrot.slane %v2339, %v2348
    %v2351 = vunpack.c.l.s4 1966171168
    %v2352 = vunpack.c.0.s8 %v2351
    %v2353 = vlaneseq
    %v2354 = vshrl.u32 %v2353, 7
    %v2355 = vsub.s32 %v2352, %v2354
    %v2356 = vrot.slane %v2340, %v2355
    %v2358 = vunpack.c.l.s4 1966171168
    %v2359 = vunpack.c.0.s8 %v2358
    %v2360 = vlaneseq
    %v2361 = vshrl.u32 %v2360, 7
    %v2362 = vsub.s32 %v2359, %v2361
    %v2363 = vrot.slane %v2341, %v2362
    %v2365 = vunpack.c.l.s4 1966171168
    %v2366 = vunpack.c.0.s8 %v2365
    %v2367 = vlaneseq
    %v2368 = vshrl.u32 %v2367, 7
    %v2369 = vsub.s32 %v2366, %v2368
    %v2370 = vrot.slane %v2342, %v2369
    %v2371 = vcombine.low %v2349, %v2356
    %v2372 = vcombine.low %v2363, %v2370
    %v2374 = vunpack.c.l.s4 1966171168
    %v2375 = vunpack.c.0.s8 %v2374
    %v2376 = vlaneseq
    %v2377 = vshrl.u32 %v2376, 7
    %v2378 = vsub.s32 %v2375, %v2377
    %v2379 = vrot.slane %v2371, %v2378
    %v2381 = vunpack.c.l.s4 1966171168
    %v2382 = vunpack.c.0.s8 %v2381
    %v2383 = vlaneseq
    %v2384 = vshrl.u32 %v2383, 7
    %v2385 = vsub.s32 %v2382, %v2384
    %v2386 = vrot.slane %v2372, %v2385
    %v2387 = vcombine.low %v2379, %v2386
    %v2388 = vcombine.low %v976, %v980
    %v2389 = vcombine.low %v984, %v988
    %v2390 = vcombine.low %v992, %v996
    %v2391 = vcombine.low %v1000, %v1004
    %v2393 = vunpack.c.l.s4 1966171168
    %v2394 = vunpack.c.0.s8 %v2393
    %v2395 = vlaneseq
    %v2396 = vshrl.u32 %v2395, 7
    %v2397 = vsub.s32 %v2394, %v2396
    %v2398 = vrot.slane %v2388, %v2397
    %v2400 = vunpack.c.l.s4 1966171168
    %v2401 = vunpack.c.0.s8 %v2400
    %v2402 = vlaneseq
    %v2403 = vshrl.u32 %v2402, 7
    %v2404 = vsub.s32 %v2401, %v2403
    %v2405 = vrot.slane %v2389, %v2404
    %v2407 = vunpack.c.l.s4 1966171168
    %v2408 = vunpack.c.0.s8 %v2407
    %v2409 = vlaneseq
    %v2410 = vshrl.u32 %v2409, 7
    %v2411 = vsub.s32 %v2408, %v2410
    %v2412 = vrot.slane %v2390, %v2411
    %v2414 = vunpack.c.l.s4 1966171168
    %v2415 = vunpack.c.0.s8 %v2414
    %v2416 = vlaneseq
    %v2417 = vshrl.u32 %v2416, 7
    %v2418 = vsub.s32 %v2415, %v2417
    %v2419 = vrot.slane %v2391, %v2418
    %v2420 = vcombine.low %v2398, %v2405
    %v2421 = vcombine.low %v2412, %v2419
    %v2423 = vunpack.c.l.s4 1966171168
    %v2424 = vunpack.c.0.s8 %v2423
    %v2425 = vlaneseq
    %v2426 = vshrl.u32 %v2425, 7
    %v2427 = vsub.s32 %v2424, %v2426
    %v2428 = vrot.slane %v2420, %v2427
    %v2430 = vunpack.c.l.s4 1966171168
    %v2431 = vunpack.c.0.s8 %v2430
    %v2432 = vlaneseq
    %v2433 = vshrl.u32 %v2432, 7
    %v2434 = vsub.s32 %v2431, %v2433
    %v2435 = vrot.slane %v2421, %v2434
    %v2436 = vcombine.low %v2428, %v2435
    %v2437 = vcombine.low %v1008, %v1012
    %v2438 = vcombine.low %v1016, %v1020
    %v2439 = vcombine.low %v1024, %v1028
    %v2440 = vcombine.low %v1032, %v1036
    %v2442 = vunpack.c.l.s4 1966171168
    %v2443 = vunpack.c.0.s8 %v2442
    %v2444 = vlaneseq
    %v2445 = vshrl.u32 %v2444, 7
    %v2446 = vsub.s32 %v2443, %v2445
    %v2447 = vrot.slane %v2437, %v2446
    %v2449 = vunpack.c.l.s4 1966171168
    %v2450 = vunpack.c.0.s8 %v2449
    %v2451 = vlaneseq
    %v2452 = vshrl.u32 %v2451, 7
    %v2453 = vsub.s32 %v2450, %v2452
    %v2454 = vrot.slane %v2438, %v2453
    %v2456 = vunpack.c.l.s4 1966171168
    %v2457 = vunpack.c.0.s8 %v2456
    %v2458 = vlaneseq
    %v2459 = vshrl.u32 %v2458, 7
    %v2460 = vsub.s32 %v2457, %v2459
    %v2461 = vrot.slane %v2439, %v2460
    %v2463 = vunpack.c.l.s4 1966171168
    %v2464 = vunpack.c.0.s8 %v2463
    %v2465 = vlaneseq
    %v2466 = vshrl.u32 %v2465, 7
    %v2467 = vsub.s32 %v2464, %v2466
    %v2468 = vrot.slane %v2440, %v2467
    %v2469 = vcombine.low %v2447, %v2454
    %v2470 = vcombine.low %v2461, %v2468
    %v2472 = vunpack.c.l.s4 1966171168
    %v2473 = vunpack.c.0.s8 %v2472
    %v2474 = vlaneseq
    %v2475 = vshrl.u32 %v2474, 7
    %v2476 = vsub.s32 %v2473, %v2475
    %v2477 = vrot.slane %v2469, %v2476
    %v2479 = vunpack.c.l.s4 1966171168
    %v2480 = vunpack.c.0.s8 %v2479
    %v2481 = vlaneseq
    %v2482 = vshrl.u32 %v2481, 7
    %v2483 = vsub.s32 %v2480, %v2482
    %v2484 = vrot.slane %v2470, %v2483
    %v2485 = vcombine.low %v2477, %v2484
    %v2486 = vcombine.low %v1040, %v1044
    %v2487 = vcombine.low %v1048, %v1052
    %v2488 = vcombine.low %v1056, %v1060
    %v2489 = vcombine.low %v1064, %v1068
    %v2491 = vunpack.c.l.s4 1966171168
    %v2492 = vunpack.c.0.s8 %v2491
    %v2493 = vlaneseq
    %v2494 = vshrl.u32 %v2493, 7
    %v2495 = vsub.s32 %v2492, %v2494
    %v2496 = vrot.slane %v2486, %v2495
    %v2498 = vunpack.c.l.s4 1966171168
    %v2499 = vunpack.c.0.s8 %v2498
    %v2500 = vlaneseq
    %v2501 = vshrl.u32 %v2500, 7
    %v2502 = vsub.s32 %v2499, %v2501
    %v2503 = vrot.slane %v2487, %v2502
    %v2505 = vunpack.c.l.s4 1966171168
    %v2506 = vunpack.c.0.s8 %v2505
    %v2507 = vlaneseq
    %v2508 = vshrl.u32 %v2507, 7
    %v2509 = vsub.s32 %v2506, %v2508
    %v2510 = vrot.slane %v2488, %v2509
    %v2512 = vunpack.c.l.s4 1966171168
    %v2513 = vunpack.c.0.s8 %v2512
    %v2514 = vlaneseq
    %v2515 = vshrl.u32 %v2514, 7
    %v2516 = vsub.s32 %v2513, %v2515
    %v2517 = vrot.slane %v2489, %v2516
    %v2518 = vcombine.low %v2496, %v2503
    %v2519 = vcombine.low %v2510, %v2517
    %v2521 = vunpack.c.l.s4 1966171168
    %v2522 = vunpack.c.0.s8 %v2521
    %v2523 = vlaneseq
    %v2524 = vshrl.u32 %v2523, 7
    %v2525 = vsub.s32 %v2522, %v2524
    %v2526 = vrot.slane %v2518, %v2525
    %v2528 = vunpack.c.l.s4 1966171168
    %v2529 = vunpack.c.0.s8 %v2528
    %v2530 = vlaneseq
    %v2531 = vshrl.u32 %v2530, 7
    %v2532 = vsub.s32 %v2529, %v2531
    %v2533 = vrot.slane %v2519, %v2532
    %v2534 = vcombine.low %v2526, %v2533
    %v2535 = vcombine.low %v1072, %v1076
    %v2536 = vcombine.low %v1080, %v1084
    %v2537 = vcombine.low %v1088, %v1092
    %v2538 = vcombine.low %v1096, %v1100
    %v2540 = vunpack.c.l.s4 1966171168
    %v2541 = vunpack.c.0.s8 %v2540
    %v2542 = vlaneseq
    %v2543 = vshrl.u32 %v2542, 7
    %v2544 = vsub.s32 %v2541, %v2543
    %v2545 = vrot.slane %v2535, %v2544
    %v2547 = vunpack.c.l.s4 1966171168
    %v2548 = vunpack.c.0.s8 %v2547
    %v2549 = vlaneseq
    %v2550 = vshrl.u32 %v2549, 7
    %v2551 = vsub.s32 %v2548, %v2550
    %v2552 = vrot.slane %v2536, %v2551
    %v2554 = vunpack.c.l.s4 1966171168
    %v2555 = vunpack.c.0.s8 %v2554
    %v2556 = vlaneseq
    %v2557 = vshrl.u32 %v2556, 7
    %v2558 = vsub.s32 %v2555, %v2557
    %v2559 = vrot.slane %v2537, %v2558
    %v2561 = vunpack.c.l.s4 1966171168
    %v2562 = vunpack.c.0.s8 %v2561
    %v2563 = vlaneseq
    %v2564 = vshrl.u32 %v2563, 7
    %v2565 = vsub.s32 %v2562, %v2564
    %v2566 = vrot.slane %v2538, %v2565
    %v2567 = vcombine.low %v2545, %v2552
    %v2568 = vcombine.low %v2559, %v2566
    %v2570 = vunpack.c.l.s4 1966171168
    %v2571 = vunpack.c.0.s8 %v2570
    %v2572 = vlaneseq
    %v2573 = vshrl.u32 %v2572, 7
    %v2574 = vsub.s32 %v2571, %v2573
    %v2575 = vrot.slane %v2567, %v2574
    %v2577 = vunpack.c.l.s4 1966171168
    %v2578 = vunpack.c.0.s8 %v2577
    %v2579 = vlaneseq
    %v2580 = vshrl.u32 %v2579, 7
    %v2581 = vsub.s32 %v2578, %v2580
    %v2582 = vrot.slane %v2568, %v2581
    %v2583 = vcombine.low %v2575, %v2582
    %v2584 = vcombine.low %v1104, %v1108
    %v2585 = vcombine.low %v1112, %v1116
    %v2586 = vcombine.low %v1120, %v1124
    %v2587 = vcombine.low %v1128, %v1132
    %v2589 = vunpack.c.l.s4 1966171168
    %v2590 = vunpack.c.0.s8 %v2589
    %v2591 = vlaneseq
    %v2592 = vshrl.u32 %v2591, 7
    %v2593 = vsub.s32 %v2590, %v2592
    %v2594 = vrot.slane %v2584, %v2593
    %v2596 = vunpack.c.l.s4 1966171168
    %v2597 = vunpack.c.0.s8 %v2596
    %v2598 = vlaneseq
    %v2599 = vshrl.u32 %v2598, 7
    %v2600 = vsub.s32 %v2597, %v2599
    %v2601 = vrot.slane %v2585, %v2600
    %v2603 = vunpack.c.l.s4 1966171168
    %v2604 = vunpack.c.0.s8 %v2603
    %v2605 = vlaneseq
    %v2606 = vshrl.u32 %v2605, 7
    %v2607 = vsub.s32 %v2604, %v2606
    %v2608 = vrot.slane %v2586, %v2607
    %v2610 = vunpack.c.l.s4 1966171168
    %v2611 = vunpack.c.0.s8 %v2610
    %v2612 = vlaneseq
    %v2613 = vshrl.u32 %v2612, 7
    %v2614 = vsub.s32 %v2611, %v2613
    %v2615 = vrot.slane %v2587, %v2614
    %v2616 = vcombine.low %v2594, %v2601
    %v2617 = vcombine.low %v2608, %v2615
    %v2619 = vunpack.c.l.s4 1966171168
    %v2620 = vunpack.c.0.s8 %v2619
    %v2621 = vlaneseq
    %v2622 = vshrl.u32 %v2621, 7
    %v2623 = vsub.s32 %v2620, %v2622
    %v2624 = vrot.slane %v2616, %v2623
    %v2626 = vunpack.c.l.s4 1966171168
    %v2627 = vunpack.c.0.s8 %v2626
    %v2628 = vlaneseq
    %v2629 = vshrl.u32 %v2628, 7
    %v2630 = vsub.s32 %v2627, %v2629
    %v2631 = vrot.slane %v2617, %v2630
    %v2632 = vcombine.low %v2624, %v2631
    %v2633 = vcombine.low %v1136, %v1140
    %v2634 = vcombine.low %v1144, %v1148
    %v2635 = vcombine.low %v1152, %v1156
    %v2636 = vcombine.low %v1160, %v1164
    %v2638 = vunpack.c.l.s4 1966171168
    %v2639 = vunpack.c.0.s8 %v2638
    %v2640 = vlaneseq
    %v2641 = vshrl.u32 %v2640, 7
    %v2642 = vsub.s32 %v2639, %v2641
    %v2643 = vrot.slane %v2633, %v2642
    %v2645 = vunpack.c.l.s4 1966171168
    %v2646 = vunpack.c.0.s8 %v2645
    %v2647 = vlaneseq
    %v2648 = vshrl.u32 %v2647, 7
    %v2649 = vsub.s32 %v2646, %v2648
    %v2650 = vrot.slane %v2634, %v2649
    %v2652 = vunpack.c.l.s4 1966171168
    %v2653 = vunpack.c.0.s8 %v2652
    %v2654 = vlaneseq
    %v2655 = vshrl.u32 %v2654, 7
    %v2656 = vsub.s32 %v2653, %v2655
    %v2657 = vrot.slane %v2635, %v2656
    %v2659 = vunpack.c.l.s4 1966171168
    %v2660 = vunpack.c.0.s8 %v2659
    %v2661 = vlaneseq
    %v2662 = vshrl.u32 %v2661, 7
    %v2663 = vsub.s32 %v2660, %v2662
    %v2664 = vrot.slane %v2636, %v2663
    %v2665 = vcombine.low %v2643, %v2650
    %v2666 = vcombine.low %v2657, %v2664
    %v2668 = vunpack.c.l.s4 1966171168
    %v2669 = vunpack.c.0.s8 %v2668
    %v2670 = vlaneseq
    %v2671 = vshrl.u32 %v2670, 7
    %v2672 = vsub.s32 %v2669, %v2671
    %v2673 = vrot.slane %v2665, %v2672
    %v2675 = vunpack.c.l.s4 1966171168
    %v2676 = vunpack.c.0.s8 %v2675
    %v2677 = vlaneseq
    %v2678 = vshrl.u32 %v2677, 7
    %v2679 = vsub.s32 %v2676, %v2678
    %v2680 = vrot.slane %v2666, %v2679
    %v2681 = vcombine.low %v2673, %v2680
    %v2682 = vcombine.low %v1168, %v1172
    %v2683 = vcombine.low %v1176, %v1180
    %v2684 = vcombine.low %v1184, %v1188
    %v2685 = vcombine.low %v1192, %v1196
    %v2687 = vunpack.c.l.s4 1966171168
    %v2688 = vunpack.c.0.s8 %v2687
    %v2689 = vlaneseq
    %v2690 = vshrl.u32 %v2689, 7
    %v2691 = vsub.s32 %v2688, %v2690
    %v2692 = vrot.slane %v2682, %v2691
    %v2694 = vunpack.c.l.s4 1966171168
    %v2695 = vunpack.c.0.s8 %v2694
    %v2696 = vlaneseq
    %v2697 = vshrl.u32 %v2696, 7
    %v2698 = vsub.s32 %v2695, %v2697
    %v2699 = vrot.slane %v2683, %v2698
    %v2701 = vunpack.c.l.s4 1966171168
    %v2702 = vunpack.c.0.s8 %v2701
    %v2703 = vlaneseq
    %v2704 = vshrl.u32 %v2703, 7
    %v2705 = vsub.s32 %v2702, %v2704
    %v2706 = vrot.slane %v2684, %v2705
    %v2708 = vunpack.c.l.s4 1966171168
    %v2709 = vunpack.c.0.s8 %v2708
    %v2710 = vlaneseq
    %v2711 = vshrl.u32 %v2710, 7
    %v2712 = vsub.s32 %v2709, %v2711
    %v2713 = vrot.slane %v2685, %v2712
    %v2714 = vcombine.low %v2692, %v2699
    %v2715 = vcombine.low %v2706, %v2713
    %v2717 = vunpack.c.l.s4 1966171168
    %v2718 = vunpack.c.0.s8 %v2717
    %v2719 = vlaneseq
    %v2720 = vshrl.u32 %v2719, 7
    %v2721 = vsub.s32 %v2718, %v2720
    %v2722 = vrot.slane %v2714, %v2721
    %v2724 = vunpack.c.l.s4 1966171168
    %v2725 = vunpack.c.0.s8 %v2724
    %v2726 = vlaneseq
    %v2727 = vshrl.u32 %v2726, 7
    %v2728 = vsub.s32 %v2725, %v2727
    %v2729 = vrot.slane %v2715, %v2728
    %v2730 = vcombine.low %v2722, %v2729
    %v2731 = vcombine.low %v1200, %v1204
    %v2732 = vcombine.low %v1208, %v1212
    %v2733 = vcombine.low %v1216, %v1220
    %v2734 = vcombine.low %v1224, %v1228
    %v2736 = vunpack.c.l.s4 1966171168
    %v2737 = vunpack.c.0.s8 %v2736
    %v2738 = vlaneseq
    %v2739 = vshrl.u32 %v2738, 7
    %v2740 = vsub.s32 %v2737, %v2739
    %v2741 = vrot.slane %v2731, %v2740
    %v2743 = vunpack.c.l.s4 1966171168
    %v2744 = vunpack.c.0.s8 %v2743
    %v2745 = vlaneseq
    %v2746 = vshrl.u32 %v2745, 7
    %v2747 = vsub.s32 %v2744, %v2746
    %v2748 = vrot.slane %v2732, %v2747
    %v2750 = vunpack.c.l.s4 1966171168
    %v2751 = vunpack.c.0.s8 %v2750
    %v2752 = vlaneseq
    %v2753 = vshrl.u32 %v2752, 7
    %v2754 = vsub.s32 %v2751, %v2753
    %v2755 = vrot.slane %v2733, %v2754
    %v2757 = vunpack.c.l.s4 1966171168
    %v2758 = vunpack.c.0.s8 %v2757
    %v2759 = vlaneseq
    %v2760 = vshrl.u32 %v2759, 7
    %v2761 = vsub.s32 %v2758, %v2760
    %v2762 = vrot.slane %v2734, %v2761
    %v2763 = vcombine.low %v2741, %v2748
    %v2764 = vcombine.low %v2755, %v2762
    %v2766 = vunpack.c.l.s4 1966171168
    %v2767 = vunpack.c.0.s8 %v2766
    %v2768 = vlaneseq
    %v2769 = vshrl.u32 %v2768, 7
    %v2770 = vsub.s32 %v2767, %v2769
    %v2771 = vrot.slane %v2763, %v2770
    %v2773 = vunpack.c.l.s4 1966171168
    %v2774 = vunpack.c.0.s8 %v2773
    %v2775 = vlaneseq
    %v2776 = vshrl.u32 %v2775, 7
    %v2777 = vsub.s32 %v2774, %v2776
    %v2778 = vrot.slane %v2764, %v2777
    %v2779 = vcombine.low %v2771, %v2778
    %v2780 = vcombine.low %v1232, %v1236
    %v2781 = vcombine.low %v1240, %v1244
    %v2782 = vcombine.low %v1248, %v1252
    %v2783 = vcombine.low %v1256, %v1260
    %v2785 = vunpack.c.l.s4 1966171168
    %v2786 = vunpack.c.0.s8 %v2785
    %v2787 = vlaneseq
    %v2788 = vshrl.u32 %v2787, 7
    %v2789 = vsub.s32 %v2786, %v2788
    %v2790 = vrot.slane %v2780, %v2789
    %v2792 = vunpack.c.l.s4 1966171168
    %v2793 = vunpack.c.0.s8 %v2792
    %v2794 = vlaneseq
    %v2795 = vshrl.u32 %v2794, 7
    %v2796 = vsub.s32 %v2793, %v2795
    %v2797 = vrot.slane %v2781, %v2796
    %v2799 = vunpack.c.l.s4 1966171168
    %v2800 = vunpack.c.0.s8 %v2799
    %v2801 = vlaneseq
    %v2802 = vshrl.u32 %v2801, 7
    %v2803 = vsub.s32 %v2800, %v2802
    %v2804 = vrot.slane %v2782, %v2803
    %v2806 = vunpack.c.l.s4 1966171168
    %v2807 = vunpack.c.0.s8 %v2806
    %v2808 = vlaneseq
    %v2809 = vshrl.u32 %v2808, 7
    %v2810 = vsub.s32 %v2807, %v2809
    %v2811 = vrot.slane %v2783, %v2810
    %v2812 = vcombine.low %v2790, %v2797
    %v2813 = vcombine.low %v2804, %v2811
    %v2815 = vunpack.c.l.s4 1966171168
    %v2816 = vunpack.c.0.s8 %v2815
    %v2817 = vlaneseq
    %v2818 = vshrl.u32 %v2817, 7
    %v2819 = vsub.s32 %v2816, %v2818
    %v2820 = vrot.slane %v2812, %v2819
    %v2822 = vunpack.c.l.s4 1966171168
    %v2823 = vunpack.c.0.s8 %v2822
    %v2824 = vlaneseq
    %v2825 = vshrl.u32 %v2824, 7
    %v2826 = vsub.s32 %v2823, %v2825
    %v2827 = vrot.slane %v2813, %v2826
    %v2828 = vcombine.low %v2820, %v2827
    %2829 = vset.pattern.permute.xlu0 0
    %2830 = vperm.xlu0 %2829, %v1309
    %v2831 = vpop.permute.xlu0 %2830
    %2832 = vset.pattern.permute.xlu0 0
    %2833 = vperm.xlu0 %2832, %v1358
    %v2834 = vpop.permute.xlu0 %2833
    %2835 = vset.pattern.permute.xlu0 0
    %2836 = vperm.xlu0 %2835, %v1407
    %v2837 = vpop.permute.xlu0 %2836
    %2838 = vset.pattern.permute.xlu0 0
    %2839 = vperm.xlu0 %2838, %v1456
    %v2840 = vpop.permute.xlu0 %2839
    %2841 = vset.pattern.permute.xlu0 0
    %2842 = vperm.xlu0 %2841, %v1505
    %v2843 = vpop.permute.xlu0 %2842
    %2844 = vset.pattern.permute.xlu0 0
    %2845 = vperm.xlu0 %2844, %v1554
    %v2846 = vpop.permute.xlu0 %2845
    %2847 = vset.pattern.permute.xlu0 0
    %2848 = vperm.xlu0 %2847, %v1603
    %v2849 = vpop.permute.xlu0 %2848
    %2850 = vset.pattern.permute.xlu0 0
    %2851 = vperm.xlu0 %2850, %v1652
    %v2852 = vpop.permute.xlu0 %2851
    %2853 = vset.pattern.permute.xlu0 0
    %2854 = vperm.xlu0 %2853, %v1701
    %v2855 = vpop.permute.xlu0 %2854
    %2856 = vset.pattern.permute.xlu0 0
    %2857 = vperm.xlu0 %2856, %v1750
    %v2858 = vpop.permute.xlu0 %2857
    %2859 = vset.pattern.permute.xlu0 0
    %2860 = vperm.xlu0 %2859, %v1799
    %v2861 = vpop.permute.xlu0 %2860
    %2862 = vset.pattern.permute.xlu0 0
    %2863 = vperm.xlu0 %2862, %v1848
    %v2864 = vpop.permute.xlu0 %2863
    %2865 = vset.pattern.permute.xlu0 0
    %2866 = vperm.xlu0 %2865, %v1897
    %v2867 = vpop.permute.xlu0 %2866
    %2868 = vset.pattern.permute.xlu0 0
    %2869 = vperm.xlu0 %2868, %v1946
    %v2870 = vpop.permute.xlu0 %2869
    %2871 = vset.pattern.permute.xlu0 0
    %2872 = vperm.xlu0 %2871, %v1995
    %v2873 = vpop.permute.xlu0 %2872
    %2874 = vset.pattern.permute.xlu0 0
    %2875 = vperm.xlu0 %2874, %v2044
    %v2876 = vpop.permute.xlu0 %2875
    %2877 = vset.pattern.permute.xlu0 0
    %2878 = vperm.xlu0 %2877, %v2093
    %v2879 = vpop.permute.xlu0 %2878
    %2880 = vset.pattern.permute.xlu0 0
    %2881 = vperm.xlu0 %2880, %v2142
    %v2882 = vpop.permute.xlu0 %2881
    %2883 = vset.pattern.permute.xlu0 0
    %2884 = vperm.xlu0 %2883, %v2191
    %v2885 = vpop.permute.xlu0 %2884
    %2886 = vset.pattern.permute.xlu0 0
    %2887 = vperm.xlu0 %2886, %v2240
    %v2888 = vpop.permute.xlu0 %2887
    %2889 = vset.pattern.permute.xlu0 0
    %2890 = vperm.xlu0 %2889, %v2289
    %v2891 = vpop.permute.xlu0 %2890
    %2892 = vset.pattern.permute.xlu0 0
    %2893 = vperm.xlu0 %2892, %v2338
    %v2894 = vpop.permute.xlu0 %2893
    %2895 = vset.pattern.permute.xlu0 0
    %2896 = vperm.xlu0 %2895, %v2387
    %v2897 = vpop.permute.xlu0 %2896
    %2898 = vset.pattern.permute.xlu0 0
    %2899 = vperm.xlu0 %2898, %v2436
    %v2900 = vpop.permute.xlu0 %2899
    %2901 = vset.pattern.permute.xlu0 0
    %2902 = vperm.xlu0 %2901, %v2485
    %v2903 = vpop.permute.xlu0 %2902
    %2904 = vset.pattern.permute.xlu0 0
    %2905 = vperm.xlu0 %2904, %v2534
    %v2906 = vpop.permute.xlu0 %2905
    %2907 = vset.pattern.permute.xlu0 0
    %2908 = vperm.xlu0 %2907, %v2583
    %v2909 = vpop.permute.xlu0 %2908
    %2910 = vset.pattern.permute.xlu0 0
    %2911 = vperm.xlu0 %2910, %v2632
    %v2912 = vpop.permute.xlu0 %2911
    %2913 = vset.pattern.permute.xlu0 0
    %2914 = vperm.xlu0 %2913, %v2681
    %v2915 = vpop.permute.xlu0 %2914
    %2916 = vset.pattern.permute.xlu0 0
    %2917 = vperm.xlu0 %2916, %v2730
    %v2918 = vpop.permute.xlu0 %2917
    %2919 = vset.pattern.permute.xlu0 0
    %2920 = vperm.xlu0 %2919, %v2779
    %v2921 = vpop.permute.xlu0 %2920
    %2922 = vset.pattern.permute.xlu0 0
    %2923 = vperm.xlu0 %2922, %v2828
    %v2924 = vpop.permute.xlu0 %2923
    %v2925 = vlaneseq
    %v2926 = vand.u32 %v2925, 127
    %v2927 = vlaneseq
    %v2928 = vshrl.u32 %v2927, 7
    %v2929 = vsub.s32 %v2926, %v2928
    %v2930 = vrot.slane %v2831, %v2929
    %v2931 = vadd.s32 %v2926, 4294967288
    %v2932 = vlaneseq
    %v2933 = vshrl.u32 %v2932, 7
    %v2934 = vsub.s32 %v2931, %v2933
    %v2935 = vrot.slane %v2834, %v2934
    %vm2936 = vcmask 130112
    %v2937 = vsel %vm2936, %v2935, %v2930
    %v2938 = vadd.s32 %v2926, 4294967280
    %v2939 = vlaneseq
    %v2940 = vshrl.u32 %v2939, 7
    %v2941 = vsub.s32 %v2938, %v2940
    %v2942 = vrot.slane %v2837, %v2941
    %vm2943 = vcmask 195712
    %v2944 = vsel %vm2943, %v2942, %v2937
    %v2945 = vadd.s32 %v2926, 4294967272
    %v2946 = vlaneseq
    %v2947 = vshrl.u32 %v2946, 7
    %v2948 = vsub.s32 %v2945, %v2947
    %v2949 = vrot.slane %v2840, %v2948
    %vm2950 = vcmask 261312
    %v2951 = vsel %vm2950, %v2949, %v2944
    %v2952 = vadd.s32 %v2926, 4294967264
    %v2953 = vlaneseq
    %v2954 = vshrl.u32 %v2953, 7
    %v2955 = vsub.s32 %v2952, %v2954
    %v2956 = vrot.slane %v2843, %v2955
    %vm2957 = vcmask 326912
    %v2958 = vsel %vm2957, %v2956, %v2951
    %v2959 = vadd.s32 %v2926, 4294967256
    %v2960 = vlaneseq
    %v2961 = vshrl.u32 %v2960, 7
    %v2962 = vsub.s32 %v2959, %v2961
    %v2963 = vrot.slane %v2846, %v2962
    %vm2964 = vcmask 392512
    %v2965 = vsel %vm2964, %v2963, %v2958
    %v2966 = vadd.s32 %v2926, 4294967248
    %v2967 = vlaneseq
    %v2968 = vshrl.u32 %v2967, 7
    %v2969 = vsub.s32 %v2966, %v2968
    %v2970 = vrot.slane %v2849, %v2969
    %vm2971 = vcmask 458112
    %v2972 = vsel %vm2971, %v2970, %v2965
    %v2973 = vadd.s32 %v2926, 4294967240
    %v2974 = vlaneseq
    %v2975 = vshrl.u32 %v2974, 7
    %v2976 = vsub.s32 %v2973, %v2975
    %v2977 = vrot.slane %v2852, %v2976
    %vm2978 = vcmask 523712
    %v2979 = vsel %vm2978, %v2977, %v2972
    %v2980 = vadd.s32 %v2926, 4294967232
    %v2981 = vlaneseq
    %v2982 = vshrl.u32 %v2981, 7
    %v2983 = vsub.s32 %v2980, %v2982
    %v2984 = vrot.slane %v2855, %v2983
    %vm2985 = vcmask 589312
    %v2986 = vsel %vm2985, %v2984, %v2979
    %v2987 = vadd.s32 %v2926, 4294967224
    %v2988 = vlaneseq
    %v2989 = vshrl.u32 %v2988, 7
    %v2990 = vsub.s32 %v2987, %v2989
    %v2991 = vrot.slane %v2858, %v2990
    %vm2992 = vcmask 654912
    %v2993 = vsel %vm2992, %v2991, %v2986
    %v2994 = vadd.s32 %v2926, 4294967216
    %v2995 = vlaneseq
    %v2996 = vshrl.u32 %v2995, 7
    %v2997 = vsub.s32 %v2994, %v2996
    %v2998 = vrot.slane %v2861, %v2997
    %vm2999 = vcmask 720512
    %v3000 = vsel %vm2999, %v2998, %v2993
    %v3001 = vadd.s32 %v2926, 4294967208
    %v3002 = vlaneseq
    %v3003 = vshrl.u32 %v3002, 7
    %v3004 = vsub.s32 %v3001, %v3003
    %v3005 = vrot.slane %v2864, %v3004
    %vm3006 = vcmask 786112
    %v3007 = vsel %vm3006, %v3005, %v3000
    %v3008 = vadd.s32 %v2926, 4294967200
    %v3009 = vlaneseq
    %v3010 = vshrl.u32 %v3009, 7
    %v3011 = vsub.s32 %v3008, %v3010
    %v3012 = vrot.slane %v2867, %v3011
    %vm3013 = vcmask 851712
    %v3014 = vsel %vm3013, %v3012, %v3007
    %v3015 = vadd.s32 %v2926, 4294967192
    %v3016 = vlaneseq
    %v3017 = vshrl.u32 %v3016, 7
    %v3018 = vsub.s32 %v3015, %v3017
    %v3019 = vrot.slane %v2870, %v3018
    %vm3020 = vcmask 917312
    %v3021 = vsel %vm3020, %v3019, %v3014
    %v3022 = vadd.s32 %v2926, 4294967184
    %v3023 = vlaneseq
    %v3024 = vshrl.u32 %v3023, 7
    %v3025 = vsub.s32 %v3022, %v3024
    %v3026 = vrot.slane %v2873, %v3025
    %vm3027 = vcmask 982912
    %v3028 = vsel %vm3027, %v3026, %v3021
    %v3029 = vadd.s32 %v2926, 4294967176
    %v3030 = vlaneseq
    %v3031 = vshrl.u32 %v3030, 7
    %v3032 = vsub.s32 %v3029, %v3031
    %v3033 = vrot.slane %v2876, %v3032
    %vm3034 = vcmask 1048512
    %v3035 = vsel %vm3034, %v3033, %v3028
    %v3036 = vlaneseq
    %v3037 = vshrl.u32 %v3036, 7
    %v3038 = vsub.s32 %v2926, %v3037
    %v3039 = vrot.slane %v2879, %v3038
    %v3040 = vlaneseq
    %v3041 = vshrl.u32 %v3040, 7
    %v3042 = vsub.s32 %v2931, %v3041
    %v3043 = vrot.slane %v2882, %v3042
    %v3044 = vsel %vm2936, %v3043, %v3039
    %v3045 = vlaneseq
    %v3046 = vshrl.u32 %v3045, 7
    %v3047 = vsub.s32 %v2938, %v3046
    %v3048 = vrot.slane %v2885, %v3047
    %v3049 = vsel %vm2943, %v3048, %v3044
    %v3050 = vlaneseq
    %v3051 = vshrl.u32 %v3050, 7
    %v3052 = vsub.s32 %v2945, %v3051
    %v3053 = vrot.slane %v2888, %v3052
    %v3054 = vsel %vm2950, %v3053, %v3049
    %v3055 = vlaneseq
    %v3056 = vshrl.u32 %v3055, 7
    %v3057 = vsub.s32 %v2952, %v3056
    %v3058 = vrot.slane %v2891, %v3057
    %v3059 = vsel %vm2957, %v3058, %v3054
    %v3060 = vlaneseq
    %v3061 = vshrl.u32 %v3060, 7
    %v3062 = vsub.s32 %v2959, %v3061
    %v3063 = vrot.slane %v2894, %v3062
    %v3064 = vsel %vm2964, %v3063, %v3059
    %v3065 = vlaneseq
    %v3066 = vshrl.u32 %v3065, 7
    %v3067 = vsub.s32 %v2966, %v3066
    %v3068 = vrot.slane %v2897, %v3067
    %v3069 = vsel %vm2971, %v3068, %v3064
    %v3070 = vlaneseq
    %v3071 = vshrl.u32 %v3070, 7
    %v3072 = vsub.s32 %v2973, %v3071
    %v3073 = vrot.slane %v2900, %v3072
    %v3074 = vsel %vm2978, %v3073, %v3069
    %v3075 = vlaneseq
    %v3076 = vshrl.u32 %v3075, 7
    %v3077 = vsub.s32 %v2980, %v3076
    %v3078 = vrot.slane %v2903, %v3077
    %v3079 = vsel %vm2985, %v3078, %v3074
    %v3080 = vlaneseq
    %v3081 = vshrl.u32 %v3080, 7
    %v3082 = vsub.s32 %v2987, %v3081
    %v3083 = vrot.slane %v2906, %v3082
    %v3084 = vsel %vm2992, %v3083, %v3079
    %v3085 = vlaneseq
    %v3086 = vshrl.u32 %v3085, 7
    %v3087 = vsub.s32 %v2994, %v3086
    %v3088 = vrot.slane %v2909, %v3087
    %v3089 = vsel %vm2999, %v3088, %v3084
    %v3090 = vlaneseq
    %v3091 = vshrl.u32 %v3090, 7
    %v3092 = vsub.s32 %v3001, %v3091
    %v3093 = vrot.slane %v2912, %v3092
    %v3094 = vsel %vm3006, %v3093, %v3089
    %v3095 = vlaneseq
    %v3096 = vshrl.u32 %v3095, 7
    %v3097 = vsub.s32 %v3008, %v3096
    %v3098 = vrot.slane %v2915, %v3097
    %v3099 = vsel %vm3013, %v3098, %v3094
    %v3100 = vlaneseq
    %v3101 = vshrl.u32 %v3100, 7
    %v3102 = vsub.s32 %v3015, %v3101
    %v3103 = vrot.slane %v2918, %v3102
    %v3104 = vsel %vm3020, %v3103, %v3099
    %v3105 = vlaneseq
    %v3106 = vshrl.u32 %v3105, 7
    %v3107 = vsub.s32 %v3022, %v3106
    %v3108 = vrot.slane %v2921, %v3107
    %v3109 = vsel %vm3027, %v3108, %v3104
    %v3110 = vlaneseq
    %v3111 = vshrl.u32 %v3110, 7
    %v3112 = vsub.s32 %v3029, %v3111
    %v3113 = vrot.slane %v2924, %v3112
    %v3114 = vsel %vm3034, %v3113, %v3109
    %v3115 = vcombine.low %v3035, %v3114
    %v3117 = vunpack.c.l.s4 1966171168
    %v3118 = vunpack.c.0.s8 %v3117
    %v3119 = vlaneseq
    %v3120 = vshrl.u32 %v3119, 7
    %v3121 = vsub.s32 %v3118, %v3120
    %v3122 = vrot.slane %v3115, %v3121
    %v3124 = vunpack.c.l.s4 1966171168
    %v3125 = vunpack.c.0.s8 %v3124
    %v3126 = vlaneseq
    %v3127 = vshrl.u32 %v3126, 7
    %v3128 = vsub.s32 %v3125, %v3127
    %v3129 = vrot.slane %v3122, %v3128
    %v3131 = vlaneseq
    %vm3132 = vcmp.ge.s32.totalorder %v3131, 0
    %vm3133 = vcmp.lt.s32.totalorder %v3131, 256
    %vm3134 = vmand %vm3132, %vm3133
    %3135 = vst.msk [vmem:[#allocation2] sm:$0x3] %vm3134, %v3129
    // Predicated region
    $region10: #{tpu_custom_call.1} parent=1 // pred_check
      _
    $region11: #{tpu_custom_call.1} parent=1 // pred_check_branch
      %3137 = sbr.rel (0) target = $region13
    $region12: #{tpu_custom_call.1} parent=1 // pred_region
      %s3139 = ssub.s32 32, 32
      %3140 = vsyncadd [#allocation3], %s3139
      %s3142 = sshll.u32 [#allocation2], 4
      %s3143 = int_to_ptr.vmem [resolvable:$true] %s3142
      %3145 = dma.vmem_to_hbm [thread:$0]  %s3143, 32, %s2, [#allocation3]
    $region13: #{tpu_custom_call.1} parent=1 // pred_fallthru
      _
    // Predicated region
    $region14: #{tpu_custom_call.1} parent=1 // pred_check
      _
    $region15: #{tpu_custom_call.1} parent=1 // pred_check_branch
      %3147 = sbr.rel (0) target = $region17
    $region16: #{tpu_custom_call.1} parent=1 // pred_region
      %3148 = dma.done [#allocation3], 32
    $region17: #{tpu_custom_call.1} parent=1 // pred_fallthru
      _
    %3149 = vsyncpa [#allocation3], 1

</llo_original>
